<compile_context>
chip_gen: v7x
topology: tpu7x:2x2x1
jax: 0.10.0
libtpu: 0.0.40
codegen_flags: <defaults>
</compile_context>

<pallas_src>
import jax
import jax.numpy as jnp
from jax.experimental import pallas as pl
from jax.experimental.pallas import tpu as pltpu

FEATURES = 32
HIDDEN = (1024, 512, 256, 128, 64, 8)


def _round_up(n, m):
    return ((n + m - 1) // m) * m


def _mlp_kernel(x_ref,
                w1, b1, w2, b2, w3, b3, w4, b4, w5, b5, w6, b6,
                o_ref):
    # Streamed activation tile, kept in f32 for all elementwise math.
    h = x_ref[...].astype(jnp.float32)

    # Hidden layers: bf16 MXU matmul with f32 accumulation, then f32 bias+ReLU.
    for w_ref, b_ref in ((w1, b1), (w2, b2), (w3, b3), (w4, b4), (w5, b5)):
        h = jnp.dot(h.astype(jnp.bfloat16), w_ref[...],
                    preferred_element_type=jnp.float32)
        h = h + b_ref[...]            # bias is (1, out) -> broadcasts over batch
        h = jnp.maximum(h, 0.0)

    # Final linear layer (no ReLU).
    logits = jnp.dot(h.astype(jnp.bfloat16), w6[...],
                     preferred_element_type=jnp.float32) + b6[...]

    # Softmax over dim=1 (class axis = lane axis), all in f32.
    m = jnp.max(logits, axis=-1, keepdims=True)
    e = jnp.exp(logits - m)
    s = jnp.sum(e, axis=-1, keepdims=True)
    inv = pl.reciprocal(s, approx=True)     # EUP slot (otherwise idle here)
    inv = inv * (2.0 - s * inv)             # one Newton step -> ~f32 accuracy
    o_ref[...] = (e * inv).astype(o_ref.dtype)


def model_score_forward(x, params, block_m=256):
    """x: (B, FEATURES) float32.  params: list of (W, b) with W=(in,out), b=(1,out)."""
    B, F = x.shape

    # Weights go to the MXU as bf16; biases stay f32 for the VPU epilogue.
    flat = []
    for w, b in params:
        flat.append(w.astype(jnp.bfloat16))
        flat.append(b.astype(jnp.float32))

    # Batch tile: multiple of 8 (sublane), capped at block_m; pad B to a
    # whole number of tiles so the last tile is never ragged.
    bm = min(block_m, _round_up(B, 8))
    bm = _round_up(bm, 8)
    b_pad = _round_up(B, bm)
    if b_pad != B:
        x = jnp.pad(x, ((0, b_pad - B), (0, 0)))

    grid = (b_pad // bm,)

    # Streamed x tile; weights/biases resident (constant index map).
    in_specs = [pl.BlockSpec((bm, F), lambda i: (i, 0))]
    for arr in flat:
        in_specs.append(pl.BlockSpec(arr.shape, lambda i: (0, 0)))

    out_specs = pl.BlockSpec((bm, HIDDEN[-1]), lambda i: (i, 0))
    out_shape = jax.ShapeDtypeStruct((b_pad, HIDDEN[-1]), jnp.float32)

    out = pl.pallas_call(
        _mlp_kernel,
        grid=grid,
        in_specs=in_specs,
        out_specs=out_specs,
        out_shape=out_shape,
        compiler_params=pltpu.CompilerParams(
            dimension_semantics=("parallel",),   # megacore sharding on v7x
            vmem_limit_bytes=24 << 20,
        ),
    )(x, *flat)

    return out[:B]


def init_params(key, features):
    """Deterministic xavier-uniform-ish init matching the layer shapes."""
    dims = (features,) + HIDDEN
    params = []
    for i in range(len(HIDDEN)):
        key, kw, kb = jax.random.split(key, 3)
        fan_in, fan_out = dims[i], dims[i + 1]
        limit = (6.0 / (fan_in + fan_out)) ** 0.5
        w = jax.random.uniform(kw, (fan_in, fan_out), jnp.float32, -limit, limit)
        b = jax.random.uniform(kb, (1, fan_out), jnp.float32, -0.01, 0.01)
        params.append((w, b))
    return params


def reference_forward(x, params):
    """Pure-JAX reference with the same bf16-operand / f32-accumulate matmuls."""
    h = x.astype(jnp.float32)
    for i, (w, b) in enumerate(params):
        h = jnp.dot(h.astype(jnp.bfloat16), w.astype(jnp.bfloat16),
                    preferred_element_type=jnp.float32) + b
        if i < len(params) - 1:
            h = jnp.maximum(h, 0.0)
    return jax.nn.softmax(h, axis=1)


if __name__ == "__main__":
    key = jax.random.PRNGKey(0)
    key, kx = jax.random.split(key)

    batch = 2
    x = jax.random.normal(kx, (batch, FEATURES), jnp.float32)
    params = init_params(key, FEATURES)

    out = model_score_forward(x, params)
    out = jax.block_until_ready(out)

    ref = reference_forward(x, params)
    assert out.shape == (batch, HIDDEN[-1])
    assert jnp.allclose(jnp.sum(out, axis=1), 1.0, atol=1e-4)
    assert jnp.allclose(out, ref, atol=1e-4, rtol=1e-4)

    print("KERNEL_OK")
</pallas_src>

<mosaic_0001>
module attributes {stable_mosaic.version = 11 : i64} {
  func.func @_mlp_kernel(%arg0: i32, %arg1: memref<8x32xf32, #tpu.memory_space<vmem>>, %arg2: memref<32x1024xbf16, #tpu.memory_space<vmem>>, %arg3: memref<1x1024xf32, #tpu.memory_space<vmem>>, %arg4: memref<1024x512xbf16, #tpu.memory_space<vmem>>, %arg5: memref<1x512xf32, #tpu.memory_space<vmem>>, %arg6: memref<512x256xbf16, #tpu.memory_space<vmem>>, %arg7: memref<1x256xf32, #tpu.memory_space<vmem>>, %arg8: memref<256x128xbf16, #tpu.memory_space<vmem>>, %arg9: memref<1x128xf32, #tpu.memory_space<vmem>>, %arg10: memref<128x64xbf16, #tpu.memory_space<vmem>>, %arg11: memref<1x64xf32, #tpu.memory_space<vmem>>, %arg12: memref<64x8xbf16, #tpu.memory_space<vmem>>, %arg13: memref<1x8xf32, #tpu.memory_space<vmem>>, %arg14: memref<8x8xf32, #tpu.memory_space<vmem>>) attributes {dimension_semantics = [#tpu.dimension_semantics<parallel>], iteration_bounds = array<i64: 1>, scalar_prefetch = 0 : i64, scratch_operands = 0 : i64, tpu.core_type = #tpu.core_type<tc>, window_params = [{transform_indices = @transform_0, window_bounds = array<i64: 8, 32>}, {pipeline_mode = #tpu.pipeline_mode<synchronous>, transform_indices = @transform_1, window_bounds = array<i64: 32, 1024>}, {pipeline_mode = #tpu.pipeline_mode<synchronous>, transform_indices = @transform_2, window_bounds = array<i64: 1, 1024>}, {pipeline_mode = #tpu.pipeline_mode<synchronous>, transform_indices = @transform_3, window_bounds = array<i64: 1024, 512>}, {pipeline_mode = #tpu.pipeline_mode<synchronous>, transform_indices = @transform_4, window_bounds = array<i64: 1, 512>}, {pipeline_mode = #tpu.pipeline_mode<synchronous>, transform_indices = @transform_5, window_bounds = array<i64: 512, 256>}, {pipeline_mode = #tpu.pipeline_mode<synchronous>, transform_indices = @transform_6, window_bounds = array<i64: 1, 256>}, {pipeline_mode = #tpu.pipeline_mode<synchronous>, transform_indices = @transform_7, window_bounds = array<i64: 256, 128>}, {pipeline_mode = #tpu.pipeline_mode<synchronous>, transform_indices = @transform_8, window_bounds = array<i64: 1, 128>}, {pipeline_mode = #tpu.pipeline_mode<synchronous>, transform_indices = @transform_9, window_bounds = array<i64: 128, 64>}, {pipeline_mode = #tpu.pipeline_mode<synchronous>, transform_indices = @transform_10, window_bounds = array<i64: 1, 64>}, {pipeline_mode = #tpu.pipeline_mode<synchronous>, transform_indices = @transform_11, window_bounds = array<i64: 64, 8>}, {pipeline_mode = #tpu.pipeline_mode<synchronous>, transform_indices = @transform_12, window_bounds = array<i64: 1, 8>}, {transform_indices = @transform_13, window_bounds = array<i64: 8, 8>}]} {
    %c0 = arith.constant 0 : index
    %c0_0 = arith.constant 0 : index
    %0 = vector.load %arg1[%c0, %c0_0] : memref<8x32xf32, #tpu.memory_space<vmem>>, vector<8x32xf32>
    %1 = arith.truncf %0 : vector<8x32xf32> to vector<8x32xbf16>
    %c0_1 = arith.constant 0 : index
    %c0_2 = arith.constant 0 : index
    %2 = vector.load %arg2[%c0_1, %c0_2] : memref<32x1024xbf16, #tpu.memory_space<vmem>>, vector<32x1024xbf16>
    %cst = arith.constant dense<0.000000e+00> : vector<8x1024xf32>
    %3 = tpu.matmul %1, %2, %cst {dimension_numbers = #tpu.dot_dimension_numbers<[1], [0], [0], [1], [0, 0, 1, 1], [], []>} : vector<8x32xbf16>, vector<32x1024xbf16>, vector<8x1024xf32> -> vector<8x1024xf32>
    %c0_3 = arith.constant 0 : index
    %c0_4 = arith.constant 0 : index
    %4 = vector.load %arg3[%c0_3, %c0_4] : memref<1x1024xf32, #tpu.memory_space<vmem>>, vector<1x1024xf32>
    %5 = vector.broadcast %4 : vector<1x1024xf32> to vector<8x1024xf32>
    %6 = arith.addf %3, %5 : vector<8x1024xf32>
    %cst_5 = arith.constant 0.000000e+00 : f32
    %7 = vector.broadcast %cst_5 : f32 to vector<8x1024xf32>
    %8 = arith.maximumf %6, %7 : vector<8x1024xf32>
    %9 = arith.truncf %8 : vector<8x1024xf32> to vector<8x1024xbf16>
    %c0_6 = arith.constant 0 : index
    %c0_7 = arith.constant 0 : index
    %10 = vector.load %arg4[%c0_6, %c0_7] : memref<1024x512xbf16, #tpu.memory_space<vmem>>, vector<1024x512xbf16>
    %cst_8 = arith.constant dense<0.000000e+00> : vector<8x512xf32>
    %11 = tpu.matmul %9, %10, %cst_8 {dimension_numbers = #tpu.dot_dimension_numbers<[1], [0], [0], [1], [0, 0, 1, 1], [], []>} : vector<8x1024xbf16>, vector<1024x512xbf16>, vector<8x512xf32> -> vector<8x512xf32>
    %c0_9 = arith.constant 0 : index
    %c0_10 = arith.constant 0 : index
    %12 = vector.load %arg5[%c0_9, %c0_10] : memref<1x512xf32, #tpu.memory_space<vmem>>, vector<1x512xf32>
    %13 = vector.broadcast %12 : vector<1x512xf32> to vector<8x512xf32>
    %14 = arith.addf %11, %13 : vector<8x512xf32>
    %cst_11 = arith.constant 0.000000e+00 : f32
    %15 = vector.broadcast %cst_11 : f32 to vector<8x512xf32>
    %16 = arith.maximumf %14, %15 : vector<8x512xf32>
    %17 = arith.truncf %16 : vector<8x512xf32> to vector<8x512xbf16>
    %c0_12 = arith.constant 0 : index
    %c0_13 = arith.constant 0 : index
    %18 = vector.load %arg6[%c0_12, %c0_13] : memref<512x256xbf16, #tpu.memory_space<vmem>>, vector<512x256xbf16>
    %cst_14 = arith.constant dense<0.000000e+00> : vector<8x256xf32>
    %19 = tpu.matmul %17, %18, %cst_14 {dimension_numbers = #tpu.dot_dimension_numbers<[1], [0], [0], [1], [0, 0, 1, 1], [], []>} : vector<8x512xbf16>, vector<512x256xbf16>, vector<8x256xf32> -> vector<8x256xf32>
    %c0_15 = arith.constant 0 : index
    %c0_16 = arith.constant 0 : index
    %20 = vector.load %arg7[%c0_15, %c0_16] : memref<1x256xf32, #tpu.memory_space<vmem>>, vector<1x256xf32>
    %21 = vector.broadcast %20 : vector<1x256xf32> to vector<8x256xf32>
    %22 = arith.addf %19, %21 : vector<8x256xf32>
    %cst_17 = arith.constant 0.000000e+00 : f32
    %23 = vector.broadcast %cst_17 : f32 to vector<8x256xf32>
    %24 = arith.maximumf %22, %23 : vector<8x256xf32>
    %25 = arith.truncf %24 : vector<8x256xf32> to vector<8x256xbf16>
    %c0_18 = arith.constant 0 : index
    %c0_19 = arith.constant 0 : index
    %26 = vector.load %arg8[%c0_18, %c0_19] : memref<256x128xbf16, #tpu.memory_space<vmem>>, vector<256x128xbf16>
    %cst_20 = arith.constant dense<0.000000e+00> : vector<8x128xf32>
    %27 = tpu.matmul %25, %26, %cst_20 {dimension_numbers = #tpu.dot_dimension_numbers<[1], [0], [0], [1], [0, 0, 1, 1], [], []>} : vector<8x256xbf16>, vector<256x128xbf16>, vector<8x128xf32> -> vector<8x128xf32>
    %c0_21 = arith.constant 0 : index
    %c0_22 = arith.constant 0 : index
    %28 = vector.load %arg9[%c0_21, %c0_22] : memref<1x128xf32, #tpu.memory_space<vmem>>, vector<1x128xf32>
    %29 = vector.broadcast %28 : vector<1x128xf32> to vector<8x128xf32>
    %30 = arith.addf %27, %29 : vector<8x128xf32>
    %cst_23 = arith.constant 0.000000e+00 : f32
    %31 = vector.broadcast %cst_23 : f32 to vector<8x128xf32>
    %32 = arith.maximumf %30, %31 : vector<8x128xf32>
    %33 = arith.truncf %32 : vector<8x128xf32> to vector<8x128xbf16>
    %c0_24 = arith.constant 0 : index
    %c0_25 = arith.constant 0 : index
    %34 = vector.load %arg10[%c0_24, %c0_25] : memref<128x64xbf16, #tpu.memory_space<vmem>>, vector<128x64xbf16>
    %cst_26 = arith.constant dense<0.000000e+00> : vector<8x64xf32>
    %35 = tpu.matmul %33, %34, %cst_26 {dimension_numbers = #tpu.dot_dimension_numbers<[1], [0], [0], [1], [0, 0, 1, 1], [], []>} : vector<8x128xbf16>, vector<128x64xbf16>, vector<8x64xf32> -> vector<8x64xf32>
    %c0_27 = arith.constant 0 : index
    %c0_28 = arith.constant 0 : index
    %36 = vector.load %arg11[%c0_27, %c0_28] : memref<1x64xf32, #tpu.memory_space<vmem>>, vector<1x64xf32>
    %37 = vector.broadcast %36 : vector<1x64xf32> to vector<8x64xf32>
    %38 = arith.addf %35, %37 : vector<8x64xf32>
    %cst_29 = arith.constant 0.000000e+00 : f32
    %39 = vector.broadcast %cst_29 : f32 to vector<8x64xf32>
    %40 = arith.maximumf %38, %39 : vector<8x64xf32>
    %41 = arith.truncf %40 : vector<8x64xf32> to vector<8x64xbf16>
    %c0_30 = arith.constant 0 : index
    %c0_31 = arith.constant 0 : index
    %42 = vector.load %arg12[%c0_30, %c0_31] : memref<64x8xbf16, #tpu.memory_space<vmem>>, vector<64x8xbf16>
    %cst_32 = arith.constant dense<0.000000e+00> : vector<8x8xf32>
    %43 = tpu.matmul %41, %42, %cst_32 {dimension_numbers = #tpu.dot_dimension_numbers<[1], [0], [0], [1], [0, 0, 1, 1], [], []>} : vector<8x64xbf16>, vector<64x8xbf16>, vector<8x8xf32> -> vector<8x8xf32>
    %c0_33 = arith.constant 0 : index
    %c0_34 = arith.constant 0 : index
    %44 = vector.load %arg13[%c0_33, %c0_34] : memref<1x8xf32, #tpu.memory_space<vmem>>, vector<1x8xf32>
    %45 = vector.broadcast %44 : vector<1x8xf32> to vector<8x8xf32>
    %46 = arith.addf %43, %45 : vector<8x8xf32>
    %cst_35 = arith.constant dense<0xFF800000> : vector<8xf32>
    %47 = vector.multi_reduction <maximumf>, %46, %cst_35 [1] : vector<8x8xf32> to vector<8xf32>
    %48 = vector.shape_cast %47 : vector<8xf32> to vector<8x1xf32>
    %49 = vector.broadcast %48 : vector<8x1xf32> to vector<8x8xf32>
    %50 = arith.subf %46, %49 : vector<8x8xf32>
    %51 = math.exp %50 : vector<8x8xf32>
    %cst_36 = arith.constant dense<0.000000e+00> : vector<8xf32>
    %52 = vector.multi_reduction <add>, %51, %cst_36 [1] : vector<8x8xf32> to vector<8xf32>
    %53 = vector.shape_cast %52 : vector<8xf32> to vector<8x1xf32>
    %54 = tpu.reciprocal %53 {approx = true} : vector<8x1xf32> -> vector<8x1xf32>
    %55 = arith.mulf %53, %54 : vector<8x1xf32>
    %cst_37 = arith.constant 2.000000e+00 : f32
    %56 = vector.broadcast %cst_37 : f32 to vector<8x1xf32>
    %57 = arith.subf %56, %55 : vector<8x1xf32>
    %58 = arith.mulf %54, %57 : vector<8x1xf32>
    %59 = vector.broadcast %58 : vector<8x1xf32> to vector<8x8xf32>
    %60 = arith.mulf %51, %59 : vector<8x8xf32>
    %c0_38 = arith.constant 0 : index
    %c0_39 = arith.constant 0 : index
    %61 = vector.load %arg14[%c0_38, %c0_39] : memref<8x8xf32, #tpu.memory_space<vmem>>, vector<8x8xf32>
    tpu.vector_store %arg14[%c0_38, %c0_39], %60 {strides = array<i32>} : memref<8x8xf32, #tpu.memory_space<vmem>>, vector<8x8xf32>,
    return
  }
  func.func @transform_0(%arg0: i32) -> (i32, i32) {
    %c0_i32 = arith.constant 0 : i32
    %c0_i32_0 = arith.constant 0 : i32
    return %arg0, %c0_i32 : i32, i32
  }
  func.func @transform_1(%arg0: i32) -> (i32, i32) {
    %c0_i32 = arith.constant 0 : i32
    %c0_i32_0 = arith.constant 0 : i32
    %c0_i32_1 = arith.constant 0 : i32
    return %c0_i32, %c0_i32_0 : i32, i32
  }
  func.func @transform_2(%arg0: i32) -> (i32, i32) {
    %c0_i32 = arith.constant 0 : i32
    %c0_i32_0 = arith.constant 0 : i32
    %c0_i32_1 = arith.constant 0 : i32
    return %c0_i32, %c0_i32_0 : i32, i32
  }
  func.func @transform_3(%arg0: i32) -> (i32, i32) {
    %c0_i32 = arith.constant 0 : i32
    %c0_i32_0 = arith.constant 0 : i32
    %c0_i32_1 = arith.constant 0 : i32
    return %c0_i32, %c0_i32_0 : i32, i32
  }
  func.func @transform_4(%arg0: i32) -> (i32, i32) {
    %c0_i32 = arith.constant 0 : i32
    %c0_i32_0 = arith.constant 0 : i32
    %c0_i32_1 = arith.constant 0 : i32
    return %c0_i32, %c0_i32_0 : i32, i32
  }
  func.func @transform_5(%arg0: i32) -> (i32, i32) {
    %c0_i32 = arith.constant 0 : i32
    %c0_i32_0 = arith.constant 0 : i32
    %c0_i32_1 = arith.constant 0 : i32
    return %c0_i32, %c0_i32_0 : i32, i32
  }
  func.func @transform_6(%arg0: i32) -> (i32, i32) {
    %c0_i32 = arith.constant 0 : i32
    %c0_i32_0 = arith.constant 0 : i32
    %c0_i32_1 = arith.constant 0 : i32
    return %c0_i32, %c0_i32_0 : i32, i32
  }
  func.func @transform_7(%arg0: i32) -> (i32, i32) {
    %c0_i32 = arith.constant 0 : i32
    %c0_i32_0 = arith.constant 0 : i32
    %c0_i32_1 = arith.constant 0 : i32
    return %c0_i32, %c0_i32_0 : i32, i32
  }
  func.func @transform_8(%arg0: i32) -> (i32, i32) {
    %c0_i32 = arith.constant 0 : i32
    %c0_i32_0 = arith.constant 0 : i32
    %c0_i32_1 = arith.constant 0 : i32
    return %c0_i32, %c0_i32_0 : i32, i32
  }
  func.func @transform_9(%arg0: i32) -> (i32, i32) {
    %c0_i32 = arith.constant 0 : i32
    %c0_i32_0 = arith.constant 0 : i32
    %c0_i32_1 = arith.constant 0 : i32
    return %c0_i32, %c0_i32_0 : i32, i32
  }
  func.func @transform_10(%arg0: i32) -> (i32, i32) {
    %c0_i32 = arith.constant 0 : i32
    %c0_i32_0 = arith.constant 0 : i32
    %c0_i32_1 = arith.constant 0 : i32
    return %c0_i32, %c0_i32_0 : i32, i32
  }
  func.func @transform_11(%arg0: i32) -> (i32, i32) {
    %c0_i32 = arith.constant 0 : i32
    %c0_i32_0 = arith.constant 0 : i32
    %c0_i32_1 = arith.constant 0 : i32
    return %c0_i32, %c0_i32_0 : i32, i32
  }
  func.func @transform_12(%arg0: i32) -> (i32, i32) {
    %c0_i32 = arith.constant 0 : i32
    %c0_i32_0 = arith.constant 0 : i32
    %c0_i32_1 = arith.constant 0 : i32
    return %c0_i32, %c0_i32_0 : i32, i32
  }
  func.func @transform_13(%arg0: i32) -> (i32, i32) {
    %c0_i32 = arith.constant 0 : i32
    %c0_i32_0 = arith.constant 0 : i32
    return %arg0, %c0_i32 : i32, i32
  }
}

</mosaic_0001>

<llo_original>
// kernel: tpu_custom_call.1
$region0: #{tpu_custom_call.1}
  #allocation0 [shape = 'u32[]', space=smem, size = 0x4, offset = 0x4, fixed_abs, tag = 'smem constant byte address 0x4 - core index']
  #allocation1 [shape = 'u32[144,128]{1,0:T(1,128)}', space=vmem, size = 0x12000, scoped, tag = 'internal scratch']
  %s0 = inlined_call_operand.hbm [shape: f32[8,32], index: 0, kind: input, shape index: {}]
  %s1 = inlined_call_operand.vmem [shape: bf16[32,1024], index: 1, kind: input, shape index: {}]
  %s2 = inlined_call_operand.hbm [shape: f32[1,1024], index: 2, kind: input, shape index: {}]
  %s3 = inlined_call_operand.hbm [shape: bf16[1024,512], index: 3, kind: input, shape index: {}]
  %s4 = inlined_call_operand.hbm [shape: f32[1,512], index: 4, kind: input, shape index: {}]
  %s5 = inlined_call_operand.hbm [shape: bf16[512,256], index: 5, kind: input, shape index: {}]
  %s6 = inlined_call_operand.vmem [shape: f32[1,256], index: 6, kind: input, shape index: {}]
  %s7 = inlined_call_operand.hbm [shape: bf16[256,128], index: 7, kind: input, shape index: {}]
  %s8 = inlined_call_operand.hbm [shape: f32[1,128], index: 8, kind: input, shape index: {}]
  %s9 = inlined_call_operand.vmem [shape: bf16[128,64], index: 9, kind: input, shape index: {}]
  %s10 = inlined_call_operand.vmem [shape: f32[1,64], index: 10, kind: input, shape index: {}]
  %s11 = inlined_call_operand.vmem [shape: bf16[64,8], index: 11, kind: input, shape index: {}]
  %s12 = inlined_call_operand.vmem [shape: f32[1,8], index: 12, kind: input, shape index: {}]
  %s13 = inlined_call_operand.hbm [shape: f32[8,8], index: 13, kind: output, shape index: {}]
  %s14 = sld [smem:[#allocation0]]
  $region90: #{tpu_custom_call.1} parent=0
    _
  %s16 = ssub.s32 1, %s14
  %s17 = scalar_select 0, %s16, %s14
  $region1: #{tpu_custom_call.1} parent=0
    #allocation2 [shape = 'u8[4096]{0}', space=vmem, size = 0x1000, scoped, tag = 'input window, operand 0, single buffered']
    #allocation3 [shape = 's32[1]{0}', space=sflag, size = 0x4, scoped, tag = 'scoped memory for tpu_custom_call.1']
    #allocation4 [shape = 's32[1]{0}', space=sflag, size = 0x4, scoped, tag = 'scoped memory for tpu_custom_call.1']
    #allocation5 [shape = 'u8[4096]{0}', space=vmem, size = 0x1000, scoped, tag = 'input window, operand 2, single buffered']
    #allocation6 [shape = 's32[1]{0}', space=sflag, size = 0x4, scoped, tag = 'scoped memory for tpu_custom_call.1']
    #allocation7 [shape = 'u8[1048576]{0}', space=vmem, size = 0x100000, scoped, tag = 'input window, operand 3, single buffered']
    #allocation8 [shape = 'u8[2048]{0}', space=vmem, size = 0x800, scoped, tag = 'input window, operand 4, single buffered']
    #allocation9 [shape = 's32[1]{0}', space=sflag, size = 0x4, scoped, tag = 'scoped memory for tpu_custom_call.1']
    #allocation10 [shape = 'u8[262144]{0}', space=vmem, size = 0x40000, scoped, tag = 'input window, operand 5, single buffered']
    #allocation11 [shape = 'u8[65536]{0}', space=vmem, size = 0x10000, scoped, tag = 'input window, operand 7, single buffered']
    #allocation12 [shape = 's32[1]{0}', space=sflag, size = 0x4, scoped, tag = 'scoped memory for tpu_custom_call.1']
    #allocation13 [shape = 'u8[512]{0}', space=vmem, size = 0x400, scoped, tag = 'input window, operand 8, single buffered']
    #allocation14 [shape = 'u8[4096]{0}', space=vmem, size = 0x1000, scoped, tag = 'output window, operand 0, single buffered']
    %18 = vsyncpa [#allocation3], 0
    %19 = vsyncpa [#allocation6], 0
    %20 = vsyncpa [#allocation9], 0
    %21 = vsyncpa [#allocation12], 0
    %22 = vsyncpa [#allocation4], 0
    // Predicated region
    $region2: #{tpu_custom_call.1} parent=1 // pred_check
      _
    $region3: #{tpu_custom_call.1} parent=1 // pred_check_branch
      %24 = sbr.rel (0) target = $region5
    $region4: #{tpu_custom_call.1} parent=1 // pred_region
      %s26 = ssub.s32 128, 128
      %27 = vsyncadd [#allocation3], %s26
      %s29 = sshll.u32 [#allocation2], 4
      %s30 = int_to_ptr.vmem [resolvable:$true] %s29
      %32 = dma.hbm_to_vmem [thread:$0]  %s0, 128, %s30, [#allocation3]
    $region5: #{tpu_custom_call.1} parent=1 // pred_fallthru
      _
    // Predicated region
    $region6: #{tpu_custom_call.1} parent=1 // pred_check
      _
    $region7: #{tpu_custom_call.1} parent=1 // pred_check_branch
      %34 = sbr.rel (0) target = $region9
    $region8: #{tpu_custom_call.1} parent=1 // pred_region
      _
    $region9: #{tpu_custom_call.1} parent=1 // pred_fallthru
      _
    // Predicated region
    $region10: #{tpu_custom_call.1} parent=1 // pred_check
      _
    $region11: #{tpu_custom_call.1} parent=1 // pred_check_branch
      %36 = sbr.rel (0) target = $region13
    $region12: #{tpu_custom_call.1} parent=1 // pred_region
      %s38 = ssub.s32 128, 128
      %39 = vsyncadd [#allocation6], %s38
      %s41 = sshll.u32 [#allocation5], 4
      %s42 = int_to_ptr.vmem [resolvable:$true] %s41
      %44 = dma.hbm_to_vmem [thread:$0]  %s2, 128, %s42, [#allocation6]
    $region13: #{tpu_custom_call.1} parent=1 // pred_fallthru
      _
    // Predicated region
    $region14: #{tpu_custom_call.1} parent=1 // pred_check
      _
    $region15: #{tpu_custom_call.1} parent=1 // pred_check_branch
      %46 = sbr.rel (0) target = $region17
    $region16: #{tpu_custom_call.1} parent=1 // pred_region
      %s48 = ssub.s32 32768, 32768
      %49 = vsyncadd [#allocation6], %s48
      %s50 = sshll.u32 [#allocation7], 4
      %s51 = int_to_ptr.vmem [resolvable:$true] %s50
      %56 = dma.hbm_to_vmem [thread:$0]  %s3, 32768, %s51, [#allocation6], 256, 256, 16
    $region17: #{tpu_custom_call.1} parent=1 // pred_fallthru
      _
    // Predicated region
    $region18: #{tpu_custom_call.1} parent=1 // pred_check
      _
    $region19: #{tpu_custom_call.1} parent=1 // pred_check_branch
      %58 = sbr.rel (0) target = $region21
    $region20: #{tpu_custom_call.1} parent=1 // pred_region
      %s60 = ssub.s32 64, 64
      %61 = vsyncadd [#allocation9], %s60
      %s63 = sshll.u32 [#allocation8], 4
      %s64 = int_to_ptr.vmem [resolvable:$true] %s63
      %66 = dma.hbm_to_vmem [thread:$0]  %s4, 64, %s64, [#allocation9]
    $region21: #{tpu_custom_call.1} parent=1 // pred_fallthru
      _
    // Predicated region
    $region22: #{tpu_custom_call.1} parent=1 // pred_check
      _
    $region23: #{tpu_custom_call.1} parent=1 // pred_check_branch
      %68 = sbr.rel (0) target = $region25
    $region24: #{tpu_custom_call.1} parent=1 // pred_region
      %s70 = ssub.s32 8192, 8192
      %71 = vsyncadd [#allocation9], %s70
      %s72 = sshll.u32 [#allocation10], 4
      %s73 = int_to_ptr.vmem [resolvable:$true] %s72
      %78 = dma.hbm_to_vmem [thread:$0]  %s5, 8192, %s73, [#allocation9], 128, 128, 8
    $region25: #{tpu_custom_call.1} parent=1 // pred_fallthru
      _
    // Predicated region
    $region26: #{tpu_custom_call.1} parent=1 // pred_check
      _
    $region27: #{tpu_custom_call.1} parent=1 // pred_check_branch
      %80 = sbr.rel (0) target = $region29
    $region28: #{tpu_custom_call.1} parent=1 // pred_region
      _
    $region29: #{tpu_custom_call.1} parent=1 // pred_fallthru
      _
    // Predicated region
    $region30: #{tpu_custom_call.1} parent=1 // pred_check
      _
    $region31: #{tpu_custom_call.1} parent=1 // pred_check_branch
      %82 = sbr.rel (0) target = $region33
    $region32: #{tpu_custom_call.1} parent=1 // pred_region
      %s84 = ssub.s32 2048, 2048
      %85 = vsyncadd [#allocation12], %s84
      %s86 = sshll.u32 [#allocation11], 4
      %s87 = int_to_ptr.vmem [resolvable:$true] %s86
      %92 = dma.hbm_to_vmem [thread:$0]  %s7, 2048, %s87, [#allocation12], 64, 64, 4
    $region33: #{tpu_custom_call.1} parent=1 // pred_fallthru
      _
    // Predicated region
    $region34: #{tpu_custom_call.1} parent=1 // pred_check
      _
    $region35: #{tpu_custom_call.1} parent=1 // pred_check_branch
      %94 = sbr.rel (0) target = $region37
    $region36: #{tpu_custom_call.1} parent=1 // pred_region
      %s96 = ssub.s32 16, 16
      %97 = vsyncadd [#allocation12], %s96
      %s99 = sshll.u32 [#allocation13], 4
      %s100 = int_to_ptr.vmem [resolvable:$true] %s99
      %102 = dma.hbm_to_vmem [thread:$0]  %s8, 16, %s100, [#allocation12]
    $region37: #{tpu_custom_call.1} parent=1 // pred_fallthru
      _
    // Predicated region
    $region38: #{tpu_custom_call.1} parent=1 // pred_check
      _
    $region39: #{tpu_custom_call.1} parent=1 // pred_check_branch
      %104 = sbr.rel (0) target = $region41
    $region40: #{tpu_custom_call.1} parent=1 // pred_region
      _
    $region41: #{tpu_custom_call.1} parent=1 // pred_fallthru
      _
    // Predicated region
    $region42: #{tpu_custom_call.1} parent=1 // pred_check
      _
    $region43: #{tpu_custom_call.1} parent=1 // pred_check_branch
      %106 = sbr.rel (0) target = $region45
    $region44: #{tpu_custom_call.1} parent=1 // pred_region
      _
    $region45: #{tpu_custom_call.1} parent=1 // pred_fallthru
      _
    // Predicated region
    $region46: #{tpu_custom_call.1} parent=1 // pred_check
      _
    $region47: #{tpu_custom_call.1} parent=1 // pred_check_branch
      %108 = sbr.rel (0) target = $region49
    $region48: #{tpu_custom_call.1} parent=1 // pred_region
      _
    $region49: #{tpu_custom_call.1} parent=1 // pred_fallthru
      _
    // Predicated region
    $region50: #{tpu_custom_call.1} parent=1 // pred_check
      _
    $region51: #{tpu_custom_call.1} parent=1 // pred_check_branch
      %110 = sbr.rel (0) target = $region53
    $region52: #{tpu_custom_call.1} parent=1 // pred_region
      _
    $region53: #{tpu_custom_call.1} parent=1 // pred_fallthru
      _
    // Predicated region
    $region54: #{tpu_custom_call.1} parent=1 // pred_check
      _
    $region55: #{tpu_custom_call.1} parent=1 // pred_check_branch
      %112 = sbr.rel (0) target = $region57
    $region56: #{tpu_custom_call.1} parent=1 // pred_region
      %113 = dma.done [#allocation3], 128
    $region57: #{tpu_custom_call.1} parent=1 // pred_fallthru
      _
    // Predicated region
    $region58: #{tpu_custom_call.1} parent=1 // pred_check
      _
    $region59: #{tpu_custom_call.1} parent=1 // pred_check_branch
      %115 = sbr.rel (0) target = $region61
    $region60: #{tpu_custom_call.1} parent=1 // pred_region
      %116 = dma.done [#allocation6], 128
    $region61: #{tpu_custom_call.1} parent=1 // pred_fallthru
      _
    // Predicated region
    $region62: #{tpu_custom_call.1} parent=1 // pred_check
      _
    $region63: #{tpu_custom_call.1} parent=1 // pred_check_branch
      %118 = sbr.rel (0) target = $region65
    $region64: #{tpu_custom_call.1} parent=1 // pred_region
      %119 = dma.done [#allocation6], 32768
    $region65: #{tpu_custom_call.1} parent=1 // pred_fallthru
      _
    // Predicated region
    $region66: #{tpu_custom_call.1} parent=1 // pred_check
      _
    $region67: #{tpu_custom_call.1} parent=1 // pred_check_branch
      %121 = sbr.rel (0) target = $region69
    $region68: #{tpu_custom_call.1} parent=1 // pred_region
      %122 = dma.done [#allocation9], 64
    $region69: #{tpu_custom_call.1} parent=1 // pred_fallthru
      _
    // Predicated region
    $region70: #{tpu_custom_call.1} parent=1 // pred_check
      _
    $region71: #{tpu_custom_call.1} parent=1 // pred_check_branch
      %124 = sbr.rel (0) target = $region73
    $region72: #{tpu_custom_call.1} parent=1 // pred_region
      %125 = dma.done [#allocation9], 8192
    $region73: #{tpu_custom_call.1} parent=1 // pred_fallthru
      _
    // Predicated region
    $region74: #{tpu_custom_call.1} parent=1 // pred_check
      _
    $region75: #{tpu_custom_call.1} parent=1 // pred_check_branch
      %127 = sbr.rel (0) target = $region77
    $region76: #{tpu_custom_call.1} parent=1 // pred_region
      %128 = dma.done [#allocation12], 2048
    $region77: #{tpu_custom_call.1} parent=1 // pred_fallthru
      _
    // Predicated region
    $region78: #{tpu_custom_call.1} parent=1 // pred_check
      _
    $region79: #{tpu_custom_call.1} parent=1 // pred_check_branch
      %130 = sbr.rel (0) target = $region81
    $region80: #{tpu_custom_call.1} parent=1 // pred_region
      %131 = dma.done [#allocation12], 16
    $region81: #{tpu_custom_call.1} parent=1 // pred_fallthru
      _
    %v133 = vld [vmem:[#allocation2] sm:$0xff]
    %v134 = vpack.c.bf16 %v133, %v133
    %v135 = vld [vmem:[%s1] sm:$0xff]
    %v136 = vld [vmem:[%s1 + $0x8] sm:$0xff]
    %v137 = vld [vmem:[%s1 + $0x10] sm:$0xff]
    %v138 = vld [vmem:[%s1 + $0x18] sm:$0xff]
    %v139 = vld [vmem:[%s1 + $0x20] sm:$0xff]
    %v140 = vld [vmem:[%s1 + $0x28] sm:$0xff]
    %v141 = vld [vmem:[%s1 + $0x30] sm:$0xff]
    %v142 = vld [vmem:[%s1 + $0x38] sm:$0xff]
    %v143 = vld [vmem:[%s1 + $0x40] sm:$0xff]
    %v144 = vld [vmem:[%s1 + $0x48] sm:$0xff]
    %v145 = vld [vmem:[%s1 + $0x50] sm:$0xff]
    %v146 = vld [vmem:[%s1 + $0x58] sm:$0xff]
    %v147 = vld [vmem:[%s1 + $0x60] sm:$0xff]
    %v148 = vld [vmem:[%s1 + $0x68] sm:$0xff]
    %v149 = vld [vmem:[%s1 + $0x70] sm:$0xff]
    %v150 = vld [vmem:[%s1 + $0x78] sm:$0xff]
    %v151 = vld [vmem:[#allocation5] sm:$0xff]
    %v153 = vlaneseq
    %v154 = vshrl.u32 %v153, 7
    %v155 = vsub.s32 0, %v154
    %v156 = vrot.slane %v151, %v155
    %v157 = vlaneseq
    %v158 = vshrl.u32 %v157, 7
    %v159 = vsub.s32 1, %v158
    %v160 = vrot.slane %v151, %v159
    %v161 = vlaneseq
    %v162 = vshrl.u32 %v161, 7
    %v163 = vsub.s32 2, %v162
    %v164 = vrot.slane %v151, %v163
    %v165 = vlaneseq
    %v166 = vshrl.u32 %v165, 7
    %v167 = vsub.s32 3, %v166
    %v168 = vrot.slane %v151, %v167
    %v169 = vlaneseq
    %v170 = vshrl.u32 %v169, 7
    %v171 = vsub.s32 4, %v170
    %v172 = vrot.slane %v151, %v171
    %v173 = vlaneseq
    %v174 = vshrl.u32 %v173, 7
    %v175 = vsub.s32 5, %v174
    %v176 = vrot.slane %v151, %v175
    %v177 = vlaneseq
    %v178 = vshrl.u32 %v177, 7
    %v179 = vsub.s32 6, %v178
    %v180 = vrot.slane %v151, %v179
    %v181 = vlaneseq
    %v182 = vshrl.u32 %v181, 7
    %v183 = vsub.s32 7, %v182
    %v184 = vrot.slane %v151, %v183
    %v209 = vunpack.c.l.b16 %v135
    %v210 = vunpack.c.h.b16 %v135
    %v211 = vunpack.c.l.b16 %v136
    %v212 = vunpack.c.h.b16 %v136
    %v213 = vunpack.c.l.b16 %v137
    %v214 = vunpack.c.h.b16 %v137
    %v215 = vunpack.c.l.b16 %v138
    %v216 = vunpack.c.h.b16 %v138
    %v217 = vunpack.c.l.b16 %v139
    %v218 = vunpack.c.h.b16 %v139
    %v219 = vunpack.c.l.b16 %v140
    %v220 = vunpack.c.h.b16 %v140
    %v221 = vunpack.c.l.b16 %v141
    %v222 = vunpack.c.h.b16 %v141
    %v223 = vunpack.c.l.b16 %v142
    %v224 = vunpack.c.h.b16 %v142
    %v225 = vunpack.c.l.b16 %v143
    %v226 = vunpack.c.h.b16 %v143
    %v227 = vunpack.c.l.b16 %v144
    %v228 = vunpack.c.h.b16 %v144
    %v229 = vunpack.c.l.b16 %v145
    %v230 = vunpack.c.h.b16 %v145
    %v231 = vunpack.c.l.b16 %v146
    %v232 = vunpack.c.h.b16 %v146
    %v233 = vunpack.c.l.b16 %v147
    %v234 = vunpack.c.h.b16 %v147
    %v235 = vunpack.c.l.b16 %v148
    %v236 = vunpack.c.h.b16 %v148
    %v237 = vunpack.c.l.b16 %v149
    %v238 = vunpack.c.h.b16 %v149
    %v239 = vunpack.c.l.b16 %v150
    %v240 = vunpack.c.h.b16 %v150
    %v241 = vpack.c.b16 %v217, %v209
    %v242 = vpack.c.b16 %v218, %v210
    %v243 = vpack.c.b16 %v219, %v211
    %v244 = vpack.c.b16 %v220, %v212
    %v245 = vpack.c.b16 %v221, %v213
    %v246 = vpack.c.b16 %v222, %v214
    %v247 = vpack.c.b16 %v223, %v215
    %v248 = vpack.c.b16 %v224, %v216
    %v249 = vpack.c.b16 %v233, %v225
    %v250 = vpack.c.b16 %v234, %v226
    %v251 = vpack.c.b16 %v235, %v227
    %v252 = vpack.c.b16 %v236, %v228
    %v253 = vpack.c.b16 %v237, %v229
    %v254 = vpack.c.b16 %v238, %v230
    %v255 = vpack.c.b16 %v239, %v231
    %v256 = vpack.c.b16 %v240, %v232
    %vm273 = vcmask 261120
    %v275 = vsel %vm273, %v134, 0
    %277 = vmatprep.subr.bf16.mxu0 %v242
    %278 = vmatpush1.bf16.msra.mxu0 %v241
    %279 = vmatprep.subr.bf16.mxu0 %v250
    %280 = vmatpush1.bf16.msra.mxu0 %v249
    %281 = vmatprep.subr.bf16.mxu0 0
    %282 = vmatpush1.bf16.msra.mxu0 0
    %283 = vmatprep.subr.bf16.mxu0 0
    %284 = vmatpush1.bf16.msra.mxu0 0
    %285 = vmatprep.subr.bf16.mxu0 0
    %286 = vmatpush1.bf16.msra.mxu0 0
    %287 = vmatprep.subr.bf16.mxu0 0
    %288 = vmatpush1.bf16.msra.mxu0 0
    %289 = vmatprep.subr.bf16.mxu0 0
    %290 = vmatpush1.bf16.msra.mxu0 0
    %291 = vmatprep.subr.bf16.mxu0 0
    %292 = vmatpush1.bf16.msra.mxu0 0
    %293 = vmatprep.subr.bf16.mxu0 0
    %294 = vmatpush1.bf16.msra.mxu0 0
    %295 = vmatprep.subr.bf16.mxu0 0
    %296 = vmatpush1.bf16.msra.mxu0 0
    %297 = vmatprep.subr.bf16.mxu0 0
    %298 = vmatpush1.bf16.msra.mxu0 0
    %299 = vmatprep.subr.bf16.mxu0 0
    %300 = vmatpush1.bf16.msra.mxu0 0
    %301 = vmatprep.subr.bf16.mxu0 0
    %302 = vmatpush1.bf16.msra.mxu0 0
    %303 = vmatprep.subr.bf16.mxu0 0
    %304 = vmatpush1.bf16.msra.mxu0 0
    %305 = vmatprep.subr.bf16.mxu0 0
    %306 = vmatpush1.bf16.msra.mxu0 0
    %307 = vmatprep.subr.bf16.mxu0 0
    %308 = vmatpush1.bf16.msra.mxu0 0
    %309 = vmatprep.mubr.bf16.mxu0 0
    %310 = vmatmul.mubr.bf16.gmra.mrb[0].mxu0 %v275
    %v311 = vpop.f32.mrb[0].mxu0
    %v312 = vadd.f32 %v156, %v311
    %v313 = vpop.f32.mrb[0].mxu0
    %v314 = vadd.f32 %v160, %v313
    %v315 = vpop.f32.mrb[0].mxu0
    %v316 = vpop.f32.mrb[0].mxu0
    %317 = vdwg.mxu0
    %318 = vmatprep.subr.bf16.mxu0 %v244
    %319 = vmatpush1.bf16.msra.mxu0 %v243
    %320 = vmatprep.subr.bf16.mxu0 %v252
    %321 = vmatpush1.bf16.msra.mxu0 %v251
    %322 = vmatprep.subr.bf16.mxu0 0
    %323 = vmatpush1.bf16.msra.mxu0 0
    %324 = vmatprep.subr.bf16.mxu0 0
    %325 = vmatpush1.bf16.msra.mxu0 0
    %326 = vmatprep.subr.bf16.mxu0 0
    %327 = vmatpush1.bf16.msra.mxu0 0
    %328 = vmatprep.subr.bf16.mxu0 0
    %329 = vmatpush1.bf16.msra.mxu0 0
    %330 = vmatprep.subr.bf16.mxu0 0
    %331 = vmatpush1.bf16.msra.mxu0 0
    %332 = vmatprep.subr.bf16.mxu0 0
    %333 = vmatpush1.bf16.msra.mxu0 0
    %334 = vmatprep.subr.bf16.mxu0 0
    %335 = vmatpush1.bf16.msra.mxu0 0
    %336 = vmatprep.subr.bf16.mxu0 0
    %337 = vmatpush1.bf16.msra.mxu0 0
    %338 = vmatprep.subr.bf16.mxu0 0
    %339 = vmatpush1.bf16.msra.mxu0 0
    %340 = vmatprep.subr.bf16.mxu0 0
    %341 = vmatpush1.bf16.msra.mxu0 0
    %342 = vmatprep.subr.bf16.mxu0 0
    %343 = vmatpush1.bf16.msra.mxu0 0
    %344 = vmatprep.subr.bf16.mxu0 0
    %345 = vmatpush1.bf16.msra.mxu0 0
    %346 = vmatprep.subr.bf16.mxu0 0
    %347 = vmatpush1.bf16.msra.mxu0 0
    %348 = vmatprep.subr.bf16.mxu0 0
    %349 = vmatpush1.bf16.msra.mxu0 0
    %350 = vmatprep.mubr.bf16.mxu0 0
    %351 = vmatmul.mubr.bf16.gmra.mrb[0].mxu0 %v275
    %v352 = vpop.f32.mrb[0].mxu0
    %v353 = vadd.f32 %v164, %v352
    %v354 = vpop.f32.mrb[0].mxu0
    %v355 = vadd.f32 %v168, %v354
    %v356 = vpop.f32.mrb[0].mxu0
    %v357 = vpop.f32.mrb[0].mxu0
    %358 = vdwg.mxu0
    %359 = vmatprep.subr.bf16.mxu0 %v246
    %360 = vmatpush1.bf16.msra.mxu0 %v245
    %361 = vmatprep.subr.bf16.mxu0 %v254
    %362 = vmatpush1.bf16.msra.mxu0 %v253
    %363 = vmatprep.subr.bf16.mxu0 0
    %364 = vmatpush1.bf16.msra.mxu0 0
    %365 = vmatprep.subr.bf16.mxu0 0
    %366 = vmatpush1.bf16.msra.mxu0 0
    %367 = vmatprep.subr.bf16.mxu0 0
    %368 = vmatpush1.bf16.msra.mxu0 0
    %369 = vmatprep.subr.bf16.mxu0 0
    %370 = vmatpush1.bf16.msra.mxu0 0
    %371 = vmatprep.subr.bf16.mxu0 0
    %372 = vmatpush1.bf16.msra.mxu0 0
    %373 = vmatprep.subr.bf16.mxu0 0
    %374 = vmatpush1.bf16.msra.mxu0 0
    %375 = vmatprep.subr.bf16.mxu0 0
    %376 = vmatpush1.bf16.msra.mxu0 0
    %377 = vmatprep.subr.bf16.mxu0 0
    %378 = vmatpush1.bf16.msra.mxu0 0
    %379 = vmatprep.subr.bf16.mxu0 0
    %380 = vmatpush1.bf16.msra.mxu0 0
    %381 = vmatprep.subr.bf16.mxu0 0
    %382 = vmatpush1.bf16.msra.mxu0 0
    %383 = vmatprep.subr.bf16.mxu0 0
    %384 = vmatpush1.bf16.msra.mxu0 0
    %385 = vmatprep.subr.bf16.mxu0 0
    %386 = vmatpush1.bf16.msra.mxu0 0
    %387 = vmatprep.subr.bf16.mxu0 0
    %388 = vmatpush1.bf16.msra.mxu0 0
    %389 = vmatprep.subr.bf16.mxu0 0
    %390 = vmatpush1.bf16.msra.mxu0 0
    %391 = vmatprep.mubr.bf16.mxu0 0
    %392 = vmatmul.mubr.bf16.gmra.mrb[0].mxu0 %v275
    %v393 = vpop.f32.mrb[0].mxu0
    %v394 = vadd.f32 %v172, %v393
    %v395 = vpop.f32.mrb[0].mxu0
    %v396 = vadd.f32 %v176, %v395
    %v397 = vpop.f32.mrb[0].mxu0
    %v398 = vpop.f32.mrb[0].mxu0
    %399 = vdwg.mxu0
    %400 = vmatprep.subr.bf16.mxu0 %v248
    %401 = vmatpush1.bf16.msra.mxu0 %v247
    %402 = vmatprep.subr.bf16.mxu0 %v256
    %403 = vmatpush1.bf16.msra.mxu0 %v255
    %404 = vmatprep.subr.bf16.mxu0 0
    %405 = vmatpush1.bf16.msra.mxu0 0
    %406 = vmatprep.subr.bf16.mxu0 0
    %407 = vmatpush1.bf16.msra.mxu0 0
    %408 = vmatprep.subr.bf16.mxu0 0
    %409 = vmatpush1.bf16.msra.mxu0 0
    %410 = vmatprep.subr.bf16.mxu0 0
    %411 = vmatpush1.bf16.msra.mxu0 0
    %412 = vmatprep.subr.bf16.mxu0 0
    %413 = vmatpush1.bf16.msra.mxu0 0
    %414 = vmatprep.subr.bf16.mxu0 0
    %415 = vmatpush1.bf16.msra.mxu0 0
    %416 = vmatprep.subr.bf16.mxu0 0
    %417 = vmatpush1.bf16.msra.mxu0 0
    %418 = vmatprep.subr.bf16.mxu0 0
    %419 = vmatpush1.bf16.msra.mxu0 0
    %420 = vmatprep.subr.bf16.mxu0 0
    %421 = vmatpush1.bf16.msra.mxu0 0
    %422 = vmatprep.subr.bf16.mxu0 0
    %423 = vmatpush1.bf16.msra.mxu0 0
    %424 = vmatprep.subr.bf16.mxu0 0
    %425 = vmatpush1.bf16.msra.mxu0 0
    %426 = vmatprep.subr.bf16.mxu0 0
    %427 = vmatpush1.bf16.msra.mxu0 0
    %428 = vmatprep.subr.bf16.mxu0 0
    %429 = vmatpush1.bf16.msra.mxu0 0
    %430 = vmatprep.subr.bf16.mxu0 0
    %431 = vmatpush1.bf16.msra.mxu0 0
    %432 = vmatprep.mubr.bf16.mxu0 0
    %433 = vmatmul.mubr.bf16.gmra.mrb[0].mxu0 %v275
    %v434 = vpop.f32.mrb[0].mxu0
    %v435 = vadd.f32 %v180, %v434
    %v436 = vpop.f32.mrb[0].mxu0
    %v437 = vadd.f32 %v184, %v436
    %v438 = vpop.f32.mrb[0].mxu0
    %v439 = vpop.f32.mrb[0].mxu0
    %440 = vdwg.mxu0
    %v441 = vmax.f32 %v312, 0.0
    %v442 = vmax.f32 %v314, 0.0
    %v443 = vmax.f32 %v353, 0.0
    %v444 = vmax.f32 %v355, 0.0
    %v445 = vmax.f32 %v394, 0.0
    %v446 = vmax.f32 %v396, 0.0
    %v447 = vmax.f32 %v435, 0.0
    %v448 = vmax.f32 %v437, 0.0
    %v449 = vpack.c.bf16 %v441, %v441
    %v450 = vpack.c.bf16 %v442, %v442
    %v451 = vpack.c.bf16 %v443, %v443
    %v452 = vpack.c.bf16 %v444, %v444
    %v453 = vpack.c.bf16 %v445, %v445
    %v454 = vpack.c.bf16 %v446, %v446
    %v455 = vpack.c.bf16 %v447, %v447
    %v456 = vpack.c.bf16 %v448, %v448
    %v457 = vld [vmem:[#allocation7] sm:$0xff]
    %v458 = vld [vmem:[#allocation7 + $0x8] sm:$0xff]
    %v459 = vld [vmem:[#allocation7 + $0x10] sm:$0xff]
    %v460 = vld [vmem:[#allocation7 + $0x18] sm:$0xff]
    %v461 = vld [vmem:[#allocation7 + $0x20] sm:$0xff]
    %v462 = vld [vmem:[#allocation7 + $0x28] sm:$0xff]
    %v463 = vld [vmem:[#allocation7 + $0x30] sm:$0xff]
    %v464 = vld [vmem:[#allocation7 + $0x38] sm:$0xff]
    %v465 = vld [vmem:[#allocation7 + $0x40] sm:$0xff]
    %v466 = vld [vmem:[#allocation7 + $0x48] sm:$0xff]
    %v467 = vld [vmem:[#allocation7 + $0x50] sm:$0xff]
    %v468 = vld [vmem:[#allocation7 + $0x58] sm:$0xff]
    %v469 = vld [vmem:[#allocation7 + $0x60] sm:$0xff]
    %v470 = vld [vmem:[#allocation7 + $0x68] sm:$0xff]
    %v471 = vld [vmem:[#allocation7 + $0x70] sm:$0xff]
    %v472 = vld [vmem:[#allocation7 + $0x78] sm:$0xff]
    %v473 = vld [vmem:[#allocation7 + $0x80] sm:$0xff]
    %v474 = vld [vmem:[#allocation7 + $0x88] sm:$0xff]
    %v475 = vld [vmem:[#allocation7 + $0x90] sm:$0xff]
    %v476 = vld [vmem:[#allocation7 + $0x98] sm:$0xff]
    %v477 = vld [vmem:[#allocation7 + $0xa0] sm:$0xff]
    %v478 = vld [vmem:[#allocation7 + $0xa8] sm:$0xff]
    %v479 = vld [vmem:[#allocation7 + $0xb0] sm:$0xff]
    %v480 = vld [vmem:[#allocation7 + $0xb8] sm:$0xff]
    %v481 = vld [vmem:[#allocation7 + $0xc0] sm:$0xff]
    %v482 = vld [vmem:[#allocation7 + $0xc8] sm:$0xff]
    %v483 = vld [vmem:[#allocation7 + $0xd0] sm:$0xff]
    %v484 = vld [vmem:[#allocation7 + $0xd8] sm:$0xff]
    %v485 = vld [vmem:[#allocation7 + $0xe0] sm:$0xff]
    %v486 = vld [vmem:[#allocation7 + $0xe8] sm:$0xff]
    %v487 = vld [vmem:[#allocation7 + $0xf0] sm:$0xff]
    %v488 = vld [vmem:[#allocation7 + $0xf8] sm:$0xff]
    %v489 = vld [vmem:[#allocation7 + $0x100] sm:$0xff]
    %v490 = vld [vmem:[#allocation7 + $0x108] sm:$0xff]
    %v491 = vld [vmem:[#allocation7 + $0x110] sm:$0xff]
    %v492 = vld [vmem:[#allocation7 + $0x118] sm:$0xff]
    %v493 = vld [vmem:[#allocation7 + $0x120] sm:$0xff]
    %v494 = vld [vmem:[#allocation7 + $0x128] sm:$0xff]
    %v495 = vld [vmem:[#allocation7 + $0x130] sm:$0xff]
    %v496 = vld [vmem:[#allocation7 + $0x138] sm:$0xff]
    %v497 = vld [vmem:[#allocation7 + $0x140] sm:$0xff]
    %v498 = vld [vmem:[#allocation7 + $0x148] sm:$0xff]
    %v499 = vld [vmem:[#allocation7 + $0x150] sm:$0xff]
    %v500 = vld [vmem:[#allocation7 + $0x158] sm:$0xff]
    %v501 = vld [vmem:[#allocation7 + $0x160] sm:$0xff]
    %v502 = vld [vmem:[#allocation7 + $0x168] sm:$0xff]
    %v503 = vld [vmem:[#allocation7 + $0x170] sm:$0xff]
    %v504 = vld [vmem:[#allocation7 + $0x178] sm:$0xff]
    %v505 = vld [vmem:[#allocation7 + $0x180] sm:$0xff]
    %v506 = vld [vmem:[#allocation7 + $0x188] sm:$0xff]
    %v507 = vld [vmem:[#allocation7 + $0x190] sm:$0xff]
    %v508 = vld [vmem:[#allocation7 + $0x198] sm:$0xff]
    %v509 = vld [vmem:[#allocation7 + $0x1a0] sm:$0xff]
    %v510 = vld [vmem:[#allocation7 + $0x1a8] sm:$0xff]
    %v511 = vld [vmem:[#allocation7 + $0x1b0] sm:$0xff]
    %v512 = vld [vmem:[#allocation7 + $0x1b8] sm:$0xff]
    %v513 = vld [vmem:[#allocation7 + $0x1c0] sm:$0xff]
    %v514 = vld [vmem:[#allocation7 + $0x1c8] sm:$0xff]
    %v515 = vld [vmem:[#allocation7 + $0x1d0] sm:$0xff]
    %v516 = vld [vmem:[#allocation7 + $0x1d8] sm:$0xff]
    %v517 = vld [vmem:[#allocation7 + $0x1e0] sm:$0xff]
    %v518 = vld [vmem:[#allocation7 + $0x1e8] sm:$0xff]
    %v519 = vld [vmem:[#allocation7 + $0x1f0] sm:$0xff]
    %v520 = vld [vmem:[#allocation7 + $0x1f8] sm:$0xff]
    %v521 = vld [vmem:[#allocation7 + $0x200] sm:$0xff]
    %v522 = vld [vmem:[#allocation7 + $0x208] sm:$0xff]
    %v523 = vld [vmem:[#allocation7 + $0x210] sm:$0xff]
    %v524 = vld [vmem:[#allocation7 + $0x218] sm:$0xff]
    %v525 = vld [vmem:[#allocation7 + $0x220] sm:$0xff]
    %v526 = vld [vmem:[#allocation7 + $0x228] sm:$0xff]
    %v527 = vld [vmem:[#allocation7 + $0x230] sm:$0xff]
    %v528 = vld [vmem:[#allocation7 + $0x238] sm:$0xff]
    %v529 = vld [vmem:[#allocation7 + $0x240] sm:$0xff]
    %v530 = vld [vmem:[#allocation7 + $0x248] sm:$0xff]
    %v531 = vld [vmem:[#allocation7 + $0x250] sm:$0xff]
    %v532 = vld [vmem:[#allocation7 + $0x258] sm:$0xff]
    %v533 = vld [vmem:[#allocation7 + $0x260] sm:$0xff]
    %v534 = vld [vmem:[#allocation7 + $0x268] sm:$0xff]
    %v535 = vld [vmem:[#allocation7 + $0x270] sm:$0xff]
    %v536 = vld [vmem:[#allocation7 + $0x278] sm:$0xff]
    %v537 = vld [vmem:[#allocation7 + $0x280] sm:$0xff]
    %v538 = vld [vmem:[#allocation7 + $0x288] sm:$0xff]
    %v539 = vld [vmem:[#allocation7 + $0x290] sm:$0xff]
    %v540 = vld [vmem:[#allocation7 + $0x298] sm:$0xff]
    %v541 = vld [vmem:[#allocation7 + $0x2a0] sm:$0xff]
    %v542 = vld [vmem:[#allocation7 + $0x2a8] sm:$0xff]
    %v543 = vld [vmem:[#allocation7 + $0x2b0] sm:$0xff]
    %v544 = vld [vmem:[#allocation7 + $0x2b8] sm:$0xff]
    %v545 = vld [vmem:[#allocation7 + $0x2c0] sm:$0xff]
    %v546 = vld [vmem:[#allocation7 + $0x2c8] sm:$0xff]
    %v547 = vld [vmem:[#allocation7 + $0x2d0] sm:$0xff]
    %v548 = vld [vmem:[#allocation7 + $0x2d8] sm:$0xff]
    %v549 = vld [vmem:[#allocation7 + $0x2e0] sm:$0xff]
    %v550 = vld [vmem:[#allocation7 + $0x2e8] sm:$0xff]
    %v551 = vld [vmem:[#allocation7 + $0x2f0] sm:$0xff]
    %v552 = vld [vmem:[#allocation7 + $0x2f8] sm:$0xff]
    %v553 = vld [vmem:[#allocation7 + $0x300] sm:$0xff]
    %v554 = vld [vmem:[#allocation7 + $0x308] sm:$0xff]
    %v555 = vld [vmem:[#allocation7 + $0x310] sm:$0xff]
    %v556 = vld [vmem:[#allocation7 + $0x318] sm:$0xff]
    %v557 = vld [vmem:[#allocation7 + $0x320] sm:$0xff]
    %v558 = vld [vmem:[#allocation7 + $0x328] sm:$0xff]
    %v559 = vld [vmem:[#allocation7 + $0x330] sm:$0xff]
    %v560 = vld [vmem:[#allocation7 + $0x338] sm:$0xff]
    %v561 = vld [vmem:[#allocation7 + $0x340] sm:$0xff]
    %v562 = vld [vmem:[#allocation7 + $0x348] sm:$0xff]
    %v563 = vld [vmem:[#allocation7 + $0x350] sm:$0xff]
    %v564 = vld [vmem:[#allocation7 + $0x358] sm:$0xff]
    %v565 = vld [vmem:[#allocation7 + $0x360] sm:$0xff]
    %v566 = vld [vmem:[#allocation7 + $0x368] sm:$0xff]
    %v567 = vld [vmem:[#allocation7 + $0x370] sm:$0xff]
    %v568 = vld [vmem:[#allocation7 + $0x378] sm:$0xff]
    %v569 = vld [vmem:[#allocation7 + $0x380] sm:$0xff]
    %v570 = vld [vmem:[#allocation7 + $0x388] sm:$0xff]
    %v571 = vld [vmem:[#allocation7 + $0x390] sm:$0xff]
    %v572 = vld [vmem:[#allocation7 + $0x398] sm:$0xff]
    %v573 = vld [vmem:[#allocation7 + $0x3a0] sm:$0xff]
    %v574 = vld [vmem:[#allocation7 + $0x3a8] sm:$0xff]
    %v575 = vld [vmem:[#allocation7 + $0x3b0] sm:$0xff]
    %v576 = vld [vmem:[#allocation7 + $0x3b8] sm:$0xff]
    %v577 = vld [vmem:[#allocation7 + $0x3c0] sm:$0xff]
    %v578 = vld [vmem:[#allocation7 + $0x3c8] sm:$0xff]
    %v579 = vld [vmem:[#allocation7 + $0x3d0] sm:$0xff]
    %v580 = vld [vmem:[#allocation7 + $0x3d8] sm:$0xff]
    %v581 = vld [vmem:[#allocation7 + $0x3e0] sm:$0xff]
    %v582 = vld [vmem:[#allocation7 + $0x3e8] sm:$0xff]
    %v583 = vld [vmem:[#allocation7 + $0x3f0] sm:$0xff]
    %v584 = vld [vmem:[#allocation7 + $0x3f8] sm:$0xff]
    %v585 = vld [vmem:[#allocation7 + $0x400] sm:$0xff]
    %v586 = vld [vmem:[#allocation7 + $0x408] sm:$0xff]
    %v587 = vld [vmem:[#allocation7 + $0x410] sm:$0xff]
    %v588 = vld [vmem:[#allocation7 + $0x418] sm:$0xff]
    %v589 = vld [vmem:[#allocation7 + $0x420] sm:$0xff]
    %v590 = vld [vmem:[#allocation7 + $0x428] sm:$0xff]
    %v591 = vld [vmem:[#allocation7 + $0x430] sm:$0xff]
    %v592 = vld [vmem:[#allocation7 + $0x438] sm:$0xff]
    %v593 = vld [vmem:[#allocation7 + $0x440] sm:$0xff]
    %v594 = vld [vmem:[#allocation7 + $0x448] sm:$0xff]
    %v595 = vld [vmem:[#allocation7 + $0x450] sm:$0xff]
    %v596 = vld [vmem:[#allocation7 + $0x458] sm:$0xff]
    %v597 = vld [vmem:[#allocation7 + $0x460] sm:$0xff]
    %v598 = vld [vmem:[#allocation7 + $0x468] sm:$0xff]
    %v599 = vld [vmem:[#allocation7 + $0x470] sm:$0xff]
    %v600 = vld [vmem:[#allocation7 + $0x478] sm:$0xff]
    %v601 = vld [vmem:[#allocation7 + $0x480] sm:$0xff]
    %v602 = vld [vmem:[#allocation7 + $0x488] sm:$0xff]
    %v603 = vld [vmem:[#allocation7 + $0x490] sm:$0xff]
    %v604 = vld [vmem:[#allocation7 + $0x498] sm:$0xff]
    %v605 = vld [vmem:[#allocation7 + $0x4a0] sm:$0xff]
    %v606 = vld [vmem:[#allocation7 + $0x4a8] sm:$0xff]
    %v607 = vld [vmem:[#allocation7 + $0x4b0] sm:$0xff]
    %v608 = vld [vmem:[#allocation7 + $0x4b8] sm:$0xff]
    %v609 = vld [vmem:[#allocation7 + $0x4c0] sm:$0xff]
    %v610 = vld [vmem:[#allocation7 + $0x4c8] sm:$0xff]
    %v611 = vld [vmem:[#allocation7 + $0x4d0] sm:$0xff]
    %v612 = vld [vmem:[#allocation7 + $0x4d8] sm:$0xff]
    %v613 = vld [vmem:[#allocation7 + $0x4e0] sm:$0xff]
    %v614 = vld [vmem:[#allocation7 + $0x4e8] sm:$0xff]
    %v615 = vld [vmem:[#allocation7 + $0x4f0] sm:$0xff]
    %v616 = vld [vmem:[#allocation7 + $0x4f8] sm:$0xff]
    %v617 = vld [vmem:[#allocation7 + $0x500] sm:$0xff]
    %v618 = vld [vmem:[#allocation7 + $0x508] sm:$0xff]
    %v619 = vld [vmem:[#allocation7 + $0x510] sm:$0xff]
    %v620 = vld [vmem:[#allocation7 + $0x518] sm:$0xff]
    %v621 = vld [vmem:[#allocation7 + $0x520] sm:$0xff]
    %v622 = vld [vmem:[#allocation7 + $0x528] sm:$0xff]
    %v623 = vld [vmem:[#allocation7 + $0x530] sm:$0xff]
    %v624 = vld [vmem:[#allocation7 + $0x538] sm:$0xff]
    %v625 = vld [vmem:[#allocation7 + $0x540] sm:$0xff]
    %v626 = vld [vmem:[#allocation7 + $0x548] sm:$0xff]
    %v627 = vld [vmem:[#allocation7 + $0x550] sm:$0xff]
    %v628 = vld [vmem:[#allocation7 + $0x558] sm:$0xff]
    %v629 = vld [vmem:[#allocation7 + $0x560] sm:$0xff]
    %v630 = vld [vmem:[#allocation7 + $0x568] sm:$0xff]
    %v631 = vld [vmem:[#allocation7 + $0x570] sm:$0xff]
    %v632 = vld [vmem:[#allocation7 + $0x578] sm:$0xff]
    %v633 = vld [vmem:[#allocation7 + $0x580] sm:$0xff]
    %v634 = vld [vmem:[#allocation7 + $0x588] sm:$0xff]
    %v635 = vld [vmem:[#allocation7 + $0x590] sm:$0xff]
    %v636 = vld [vmem:[#allocation7 + $0x598] sm:$0xff]
    %v637 = vld [vmem:[#allocation7 + $0x5a0] sm:$0xff]
    %v638 = vld [vmem:[#allocation7 + $0x5a8] sm:$0xff]
    %v639 = vld [vmem:[#allocation7 + $0x5b0] sm:$0xff]
    %v640 = vld [vmem:[#allocation7 + $0x5b8] sm:$0xff]
    %v641 = vld [vmem:[#allocation7 + $0x5c0] sm:$0xff]
    %v642 = vld [vmem:[#allocation7 + $0x5c8] sm:$0xff]
    %v643 = vld [vmem:[#allocation7 + $0x5d0] sm:$0xff]
    %v644 = vld [vmem:[#allocation7 + $0x5d8] sm:$0xff]
    %v645 = vld [vmem:[#allocation7 + $0x5e0] sm:$0xff]
    %v646 = vld [vmem:[#allocation7 + $0x5e8] sm:$0xff]
    %v647 = vld [vmem:[#allocation7 + $0x5f0] sm:$0xff]
    %v648 = vld [vmem:[#allocation7 + $0x5f8] sm:$0xff]
    %v649 = vld [vmem:[#allocation7 + $0x600] sm:$0xff]
    %v650 = vld [vmem:[#allocation7 + $0x608] sm:$0xff]
    %v651 = vld [vmem:[#allocation7 + $0x610] sm:$0xff]
    %v652 = vld [vmem:[#allocation7 + $0x618] sm:$0xff]
    %v653 = vld [vmem:[#allocation7 + $0x620] sm:$0xff]
    %v654 = vld [vmem:[#allocation7 + $0x628] sm:$0xff]
    %v655 = vld [vmem:[#allocation7 + $0x630] sm:$0xff]
    %v656 = vld [vmem:[#allocation7 + $0x638] sm:$0xff]
    %v657 = vld [vmem:[#allocation7 + $0x640] sm:$0xff]
    %v658 = vld [vmem:[#allocation7 + $0x648] sm:$0xff]
    %v659 = vld [vmem:[#allocation7 + $0x650] sm:$0xff]
    %v660 = vld [vmem:[#allocation7 + $0x658] sm:$0xff]
    %v661 = vld [vmem:[#allocation7 + $0x660] sm:$0xff]
    %v662 = vld [vmem:[#allocation7 + $0x668] sm:$0xff]
    %v663 = vld [vmem:[#allocation7 + $0x670] sm:$0xff]
    %v664 = vld [vmem:[#allocation7 + $0x678] sm:$0xff]
    %v665 = vld [vmem:[#allocation7 + $0x680] sm:$0xff]
    %v666 = vld [vmem:[#allocation7 + $0x688] sm:$0xff]
    %v667 = vld [vmem:[#allocation7 + $0x690] sm:$0xff]
    %v668 = vld [vmem:[#allocation7 + $0x698] sm:$0xff]
    %v669 = vld [vmem:[#allocation7 + $0x6a0] sm:$0xff]
    %v670 = vld [vmem:[#allocation7 + $0x6a8] sm:$0xff]
    %v671 = vld [vmem:[#allocation7 + $0x6b0] sm:$0xff]
    %v672 = vld [vmem:[#allocation7 + $0x6b8] sm:$0xff]
    %v673 = vld [vmem:[#allocation7 + $0x6c0] sm:$0xff]
    %v674 = vld [vmem:[#allocation7 + $0x6c8] sm:$0xff]
    %v675 = vld [vmem:[#allocation7 + $0x6d0] sm:$0xff]
    %v676 = vld [vmem:[#allocation7 + $0x6d8] sm:$0xff]
    %v677 = vld [vmem:[#allocation7 + $0x6e0] sm:$0xff]
    %v678 = vld [vmem:[#allocation7 + $0x6e8] sm:$0xff]
    %v679 = vld [vmem:[#allocation7 + $0x6f0] sm:$0xff]
    %v680 = vld [vmem:[#allocation7 + $0x6f8] sm:$0xff]
    %v681 = vld [vmem:[#allocation7 + $0x700] sm:$0xff]
    %v682 = vld [vmem:[#allocation7 + $0x708] sm:$0xff]
    %v683 = vld [vmem:[#allocation7 + $0x710] sm:$0xff]
    %v684 = vld [vmem:[#allocation7 + $0x718] sm:$0xff]
    %v685 = vld [vmem:[#allocation7 + $0x720] sm:$0xff]
    %v686 = vld [vmem:[#allocation7 + $0x728] sm:$0xff]
    %v687 = vld [vmem:[#allocation7 + $0x730] sm:$0xff]
    %v688 = vld [vmem:[#allocation7 + $0x738] sm:$0xff]
    %v689 = vld [vmem:[#allocation7 + $0x740] sm:$0xff]
    %v690 = vld [vmem:[#allocation7 + $0x748] sm:$0xff]
    %v691 = vld [vmem:[#allocation7 + $0x750] sm:$0xff]
    %v692 = vld [vmem:[#allocation7 + $0x758] sm:$0xff]
    %v693 = vld [vmem:[#allocation7 + $0x760] sm:$0xff]
    %v694 = vld [vmem:[#allocation7 + $0x768] sm:$0xff]
    %v695 = vld [vmem:[#allocation7 + $0x770] sm:$0xff]
    %v696 = vld [vmem:[#allocation7 + $0x778] sm:$0xff]
    %v697 = vld [vmem:[#allocation7 + $0x780] sm:$0xff]
    %v698 = vld [vmem:[#allocation7 + $0x788] sm:$0xff]
    %v699 = vld [vmem:[#allocation7 + $0x790] sm:$0xff]
    %v700 = vld [vmem:[#allocation7 + $0x798] sm:$0xff]
    %v701 = vld [vmem:[#allocation7 + $0x7a0] sm:$0xff]
    %v702 = vld [vmem:[#allocation7 + $0x7a8] sm:$0xff]
    %v703 = vld [vmem:[#allocation7 + $0x7b0] sm:$0xff]
    %v704 = vld [vmem:[#allocation7 + $0x7b8] sm:$0xff]
    %v705 = vld [vmem:[#allocation7 + $0x7c0] sm:$0xff]
    %v706 = vld [vmem:[#allocation7 + $0x7c8] sm:$0xff]
    %v707 = vld [vmem:[#allocation7 + $0x7d0] sm:$0xff]
    %v708 = vld [vmem:[#allocation7 + $0x7d8] sm:$0xff]
    %v709 = vld [vmem:[#allocation7 + $0x7e0] sm:$0xff]
    %v710 = vld [vmem:[#allocation7 + $0x7e8] sm:$0xff]
    %v711 = vld [vmem:[#allocation7 + $0x7f0] sm:$0xff]
    %v712 = vld [vmem:[#allocation7 + $0x7f8] sm:$0xff]
    %v713 = vld [vmem:[#allocation8] sm:$0xf]
    %v715 = vlaneseq
    %v716 = vshrl.u32 %v715, 7
    %v717 = vsub.s32 0, %v716
    %v718 = vrot.slane %v713, %v717
    %v719 = vlaneseq
    %v720 = vshrl.u32 %v719, 7
    %v721 = vsub.s32 1, %v720
    %v722 = vrot.slane %v713, %v721
    %v723 = vlaneseq
    %v724 = vshrl.u32 %v723, 7
    %v725 = vsub.s32 2, %v724
    %v726 = vrot.slane %v713, %v725
    %v727 = vlaneseq
    %v728 = vshrl.u32 %v727, 7
    %v729 = vsub.s32 3, %v728
    %v730 = vrot.slane %v713, %v729
    %v991 = vunpack.c.l.b16 %v457
    %v992 = vunpack.c.h.b16 %v457
    %v993 = vunpack.c.l.b16 %v458
    %v994 = vunpack.c.h.b16 %v458
    %v995 = vunpack.c.l.b16 %v459
    %v996 = vunpack.c.h.b16 %v459
    %v997 = vunpack.c.l.b16 %v460
    %v998 = vunpack.c.h.b16 %v460
    %v999 = vunpack.c.l.b16 %v461
    %v1000 = vunpack.c.h.b16 %v461
    %v1001 = vunpack.c.l.b16 %v462
    %v1002 = vunpack.c.h.b16 %v462
    %v1003 = vunpack.c.l.b16 %v463
    %v1004 = vunpack.c.h.b16 %v463
    %v1005 = vunpack.c.l.b16 %v464
    %v1006 = vunpack.c.h.b16 %v464
    %v1007 = vunpack.c.l.b16 %v465
    %v1008 = vunpack.c.h.b16 %v465
    %v1009 = vunpack.c.l.b16 %v466
    %v1010 = vunpack.c.h.b16 %v466
    %v1011 = vunpack.c.l.b16 %v467
    %v1012 = vunpack.c.h.b16 %v467
    %v1013 = vunpack.c.l.b16 %v468
    %v1014 = vunpack.c.h.b16 %v468
    %v1015 = vunpack.c.l.b16 %v469
    %v1016 = vunpack.c.h.b16 %v469
    %v1017 = vunpack.c.l.b16 %v470
    %v1018 = vunpack.c.h.b16 %v470
    %v1019 = vunpack.c.l.b16 %v471
    %v1020 = vunpack.c.h.b16 %v471
    %v1021 = vunpack.c.l.b16 %v472
    %v1022 = vunpack.c.h.b16 %v472
    %v1023 = vunpack.c.l.b16 %v473
    %v1024 = vunpack.c.h.b16 %v473
    %v1025 = vunpack.c.l.b16 %v474
    %v1026 = vunpack.c.h.b16 %v474
    %v1027 = vunpack.c.l.b16 %v475
    %v1028 = vunpack.c.h.b16 %v475
    %v1029 = vunpack.c.l.b16 %v476
    %v1030 = vunpack.c.h.b16 %v476
    %v1031 = vunpack.c.l.b16 %v477
    %v1032 = vunpack.c.h.b16 %v477
    %v1033 = vunpack.c.l.b16 %v478
    %v1034 = vunpack.c.h.b16 %v478
    %v1035 = vunpack.c.l.b16 %v479
    %v1036 = vunpack.c.h.b16 %v479
    %v1037 = vunpack.c.l.b16 %v480
    %v1038 = vunpack.c.h.b16 %v480
    %v1039 = vunpack.c.l.b16 %v481
    %v1040 = vunpack.c.h.b16 %v481
    %v1041 = vunpack.c.l.b16 %v482
    %v1042 = vunpack.c.h.b16 %v482
    %v1043 = vunpack.c.l.b16 %v483
    %v1044 = vunpack.c.h.b16 %v483
    %v1045 = vunpack.c.l.b16 %v484
    %v1046 = vunpack.c.h.b16 %v484
    %v1047 = vunpack.c.l.b16 %v485
    %v1048 = vunpack.c.h.b16 %v485
    %v1049 = vunpack.c.l.b16 %v486
    %v1050 = vunpack.c.h.b16 %v486
    %v1051 = vunpack.c.l.b16 %v487
    %v1052 = vunpack.c.h.b16 %v487
    %v1053 = vunpack.c.l.b16 %v488
    %v1054 = vunpack.c.h.b16 %v488
    %v1055 = vunpack.c.l.b16 %v489
    %v1056 = vunpack.c.h.b16 %v489
    %v1057 = vunpack.c.l.b16 %v490
    %v1058 = vunpack.c.h.b16 %v490
    %v1059 = vunpack.c.l.b16 %v491
    %v1060 = vunpack.c.h.b16 %v491
    %v1061 = vunpack.c.l.b16 %v492
    %v1062 = vunpack.c.h.b16 %v492
    %v1063 = vunpack.c.l.b16 %v493
    %v1064 = vunpack.c.h.b16 %v493
    %v1065 = vunpack.c.l.b16 %v494
    %v1066 = vunpack.c.h.b16 %v494
    %v1067 = vunpack.c.l.b16 %v495
    %v1068 = vunpack.c.h.b16 %v495
    %v1069 = vunpack.c.l.b16 %v496
    %v1070 = vunpack.c.h.b16 %v496
    %v1071 = vunpack.c.l.b16 %v497
    %v1072 = vunpack.c.h.b16 %v497
    %v1073 = vunpack.c.l.b16 %v498
    %v1074 = vunpack.c.h.b16 %v498
    %v1075 = vunpack.c.l.b16 %v499
    %v1076 = vunpack.c.h.b16 %v499
    %v1077 = vunpack.c.l.b16 %v500
    %v1078 = vunpack.c.h.b16 %v500
    %v1079 = vunpack.c.l.b16 %v501
    %v1080 = vunpack.c.h.b16 %v501
    %v1081 = vunpack.c.l.b16 %v502
    %v1082 = vunpack.c.h.b16 %v502
    %v1083 = vunpack.c.l.b16 %v503
    %v1084 = vunpack.c.h.b16 %v503
    %v1085 = vunpack.c.l.b16 %v504
    %v1086 = vunpack.c.h.b16 %v504
    %v1087 = vunpack.c.l.b16 %v505
    %v1088 = vunpack.c.h.b16 %v505
    %v1089 = vunpack.c.l.b16 %v506
    %v1090 = vunpack.c.h.b16 %v506
    %v1091 = vunpack.c.l.b16 %v507
    %v1092 = vunpack.c.h.b16 %v507
    %v1093 = vunpack.c.l.b16 %v508
    %v1094 = vunpack.c.h.b16 %v508
    %v1095 = vunpack.c.l.b16 %v509
    %v1096 = vunpack.c.h.b16 %v509
    %v1097 = vunpack.c.l.b16 %v510
    %v1098 = vunpack.c.h.b16 %v510
    %v1099 = vunpack.c.l.b16 %v511
    %v1100 = vunpack.c.h.b16 %v511
    %v1101 = vunpack.c.l.b16 %v512
    %v1102 = vunpack.c.h.b16 %v512
    %v1103 = vunpack.c.l.b16 %v513
    %v1104 = vunpack.c.h.b16 %v513
    %v1105 = vunpack.c.l.b16 %v514
    %v1106 = vunpack.c.h.b16 %v514
    %v1107 = vunpack.c.l.b16 %v515
    %v1108 = vunpack.c.h.b16 %v515
    %v1109 = vunpack.c.l.b16 %v516
    %v1110 = vunpack.c.h.b16 %v516
    %v1111 = vunpack.c.l.b16 %v517
    %v1112 = vunpack.c.h.b16 %v517
    %v1113 = vunpack.c.l.b16 %v518
    %v1114 = vunpack.c.h.b16 %v518
    %v1115 = vunpack.c.l.b16 %v519
    %v1116 = vunpack.c.h.b16 %v519
    %v1117 = vunpack.c.l.b16 %v520
    %v1118 = vunpack.c.h.b16 %v520
    %v1119 = vunpack.c.l.b16 %v521
    %v1120 = vunpack.c.h.b16 %v521
    %v1121 = vunpack.c.l.b16 %v522
    %v1122 = vunpack.c.h.b16 %v522
    %v1123 = vunpack.c.l.b16 %v523
    %v1124 = vunpack.c.h.b16 %v523
    %v1125 = vunpack.c.l.b16 %v524
    %v1126 = vunpack.c.h.b16 %v524
    %v1127 = vunpack.c.l.b16 %v525
    %v1128 = vunpack.c.h.b16 %v525
    %v1129 = vunpack.c.l.b16 %v526
    %v1130 = vunpack.c.h.b16 %v526
    %v1131 = vunpack.c.l.b16 %v527
    %v1132 = vunpack.c.h.b16 %v527
    %v1133 = vunpack.c.l.b16 %v528
    %v1134 = vunpack.c.h.b16 %v528
    %v1135 = vunpack.c.l.b16 %v529
    %v1136 = vunpack.c.h.b16 %v529
    %v1137 = vunpack.c.l.b16 %v530
    %v1138 = vunpack.c.h.b16 %v530
    %v1139 = vunpack.c.l.b16 %v531
    %v1140 = vunpack.c.h.b16 %v531
    %v1141 = vunpack.c.l.b16 %v532
    %v1142 = vunpack.c.h.b16 %v532
    %v1143 = vunpack.c.l.b16 %v533
    %v1144 = vunpack.c.h.b16 %v533
    %v1145 = vunpack.c.l.b16 %v534
    %v1146 = vunpack.c.h.b16 %v534
    %v1147 = vunpack.c.l.b16 %v535
    %v1148 = vunpack.c.h.b16 %v535
    %v1149 = vunpack.c.l.b16 %v536
    %v1150 = vunpack.c.h.b16 %v536
    %v1151 = vunpack.c.l.b16 %v537
    %v1152 = vunpack.c.h.b16 %v537
    %v1153 = vunpack.c.l.b16 %v538
    %v1154 = vunpack.c.h.b16 %v538
    %v1155 = vunpack.c.l.b16 %v539
    %v1156 = vunpack.c.h.b16 %v539
    %v1157 = vunpack.c.l.b16 %v540
    %v1158 = vunpack.c.h.b16 %v540
    %v1159 = vunpack.c.l.b16 %v541
    %v1160 = vunpack.c.h.b16 %v541
    %v1161 = vunpack.c.l.b16 %v542
    %v1162 = vunpack.c.h.b16 %v542
    %v1163 = vunpack.c.l.b16 %v543
    %v1164 = vunpack.c.h.b16 %v543
    %v1165 = vunpack.c.l.b16 %v544
    %v1166 = vunpack.c.h.b16 %v544
    %v1167 = vunpack.c.l.b16 %v545
    %v1168 = vunpack.c.h.b16 %v545
    %v1169 = vunpack.c.l.b16 %v546
    %v1170 = vunpack.c.h.b16 %v546
    %v1171 = vunpack.c.l.b16 %v547
    %v1172 = vunpack.c.h.b16 %v547
    %v1173 = vunpack.c.l.b16 %v548
    %v1174 = vunpack.c.h.b16 %v548
    %v1175 = vunpack.c.l.b16 %v549
    %v1176 = vunpack.c.h.b16 %v549
    %v1177 = vunpack.c.l.b16 %v550
    %v1178 = vunpack.c.h.b16 %v550
    %v1179 = vunpack.c.l.b16 %v551
    %v1180 = vunpack.c.h.b16 %v551
    %v1181 = vunpack.c.l.b16 %v552
    %v1182 = vunpack.c.h.b16 %v552
    %v1183 = vunpack.c.l.b16 %v553
    %v1184 = vunpack.c.h.b16 %v553
    %v1185 = vunpack.c.l.b16 %v554
    %v1186 = vunpack.c.h.b16 %v554
    %v1187 = vunpack.c.l.b16 %v555
    %v1188 = vunpack.c.h.b16 %v555
    %v1189 = vunpack.c.l.b16 %v556
    %v1190 = vunpack.c.h.b16 %v556
    %v1191 = vunpack.c.l.b16 %v557
    %v1192 = vunpack.c.h.b16 %v557
    %v1193 = vunpack.c.l.b16 %v558
    %v1194 = vunpack.c.h.b16 %v558
    %v1195 = vunpack.c.l.b16 %v559
    %v1196 = vunpack.c.h.b16 %v559
    %v1197 = vunpack.c.l.b16 %v560
    %v1198 = vunpack.c.h.b16 %v560
    %v1199 = vunpack.c.l.b16 %v561
    %v1200 = vunpack.c.h.b16 %v561
    %v1201 = vunpack.c.l.b16 %v562
    %v1202 = vunpack.c.h.b16 %v562
    %v1203 = vunpack.c.l.b16 %v563
    %v1204 = vunpack.c.h.b16 %v563
    %v1205 = vunpack.c.l.b16 %v564
    %v1206 = vunpack.c.h.b16 %v564
    %v1207 = vunpack.c.l.b16 %v565
    %v1208 = vunpack.c.h.b16 %v565
    %v1209 = vunpack.c.l.b16 %v566
    %v1210 = vunpack.c.h.b16 %v566
    %v1211 = vunpack.c.l.b16 %v567
    %v1212 = vunpack.c.h.b16 %v567
    %v1213 = vunpack.c.l.b16 %v568
    %v1214 = vunpack.c.h.b16 %v568
    %v1215 = vunpack.c.l.b16 %v569
    %v1216 = vunpack.c.h.b16 %v569
    %v1217 = vunpack.c.l.b16 %v570
    %v1218 = vunpack.c.h.b16 %v570
    %v1219 = vunpack.c.l.b16 %v571
    %v1220 = vunpack.c.h.b16 %v571
    %v1221 = vunpack.c.l.b16 %v572
    %v1222 = vunpack.c.h.b16 %v572
    %v1223 = vunpack.c.l.b16 %v573
    %v1224 = vunpack.c.h.b16 %v573
    %v1225 = vunpack.c.l.b16 %v574
    %v1226 = vunpack.c.h.b16 %v574
    %v1227 = vunpack.c.l.b16 %v575
    %v1228 = vunpack.c.h.b16 %v575
    %v1229 = vunpack.c.l.b16 %v576
    %v1230 = vunpack.c.h.b16 %v576
    %v1231 = vunpack.c.l.b16 %v577
    %v1232 = vunpack.c.h.b16 %v577
    %v1233 = vunpack.c.l.b16 %v578
    %v1234 = vunpack.c.h.b16 %v578
    %v1235 = vunpack.c.l.b16 %v579
    %v1236 = vunpack.c.h.b16 %v579
    %v1237 = vunpack.c.l.b16 %v580
    %v1238 = vunpack.c.h.b16 %v580
    %v1239 = vunpack.c.l.b16 %v581
    %v1240 = vunpack.c.h.b16 %v581
    %v1241 = vunpack.c.l.b16 %v582
    %v1242 = vunpack.c.h.b16 %v582
    %v1243 = vunpack.c.l.b16 %v583
    %v1244 = vunpack.c.h.b16 %v583
    %v1245 = vunpack.c.l.b16 %v584
    %v1246 = vunpack.c.h.b16 %v584
    %v1247 = vunpack.c.l.b16 %v585
    %v1248 = vunpack.c.h.b16 %v585
    %v1249 = vunpack.c.l.b16 %v586
    %v1250 = vunpack.c.h.b16 %v586
    %v1251 = vunpack.c.l.b16 %v587
    %v1252 = vunpack.c.h.b16 %v587
    %v1253 = vunpack.c.l.b16 %v588
    %v1254 = vunpack.c.h.b16 %v588
    %v1255 = vunpack.c.l.b16 %v589
    %v1256 = vunpack.c.h.b16 %v589
    %v1257 = vunpack.c.l.b16 %v590
    %v1258 = vunpack.c.h.b16 %v590
    %v1259 = vunpack.c.l.b16 %v591
    %v1260 = vunpack.c.h.b16 %v591
    %v1261 = vunpack.c.l.b16 %v592
    %v1262 = vunpack.c.h.b16 %v592
    %v1263 = vunpack.c.l.b16 %v593
    %v1264 = vunpack.c.h.b16 %v593
    %v1265 = vunpack.c.l.b16 %v594
    %v1266 = vunpack.c.h.b16 %v594
    %v1267 = vunpack.c.l.b16 %v595
    %v1268 = vunpack.c.h.b16 %v595
    %v1269 = vunpack.c.l.b16 %v596
    %v1270 = vunpack.c.h.b16 %v596
    %v1271 = vunpack.c.l.b16 %v597
    %v1272 = vunpack.c.h.b16 %v597
    %v1273 = vunpack.c.l.b16 %v598
    %v1274 = vunpack.c.h.b16 %v598
    %v1275 = vunpack.c.l.b16 %v599
    %v1276 = vunpack.c.h.b16 %v599
    %v1277 = vunpack.c.l.b16 %v600
    %v1278 = vunpack.c.h.b16 %v600
    %v1279 = vunpack.c.l.b16 %v601
    %v1280 = vunpack.c.h.b16 %v601
    %v1281 = vunpack.c.l.b16 %v602
    %v1282 = vunpack.c.h.b16 %v602
    %v1283 = vunpack.c.l.b16 %v603
    %v1284 = vunpack.c.h.b16 %v603
    %v1285 = vunpack.c.l.b16 %v604
    %v1286 = vunpack.c.h.b16 %v604
    %v1287 = vunpack.c.l.b16 %v605
    %v1288 = vunpack.c.h.b16 %v605
    %v1289 = vunpack.c.l.b16 %v606
    %v1290 = vunpack.c.h.b16 %v606
    %v1291 = vunpack.c.l.b16 %v607
    %v1292 = vunpack.c.h.b16 %v607
    %v1293 = vunpack.c.l.b16 %v608
    %v1294 = vunpack.c.h.b16 %v608
    %v1295 = vunpack.c.l.b16 %v609
    %v1296 = vunpack.c.h.b16 %v609
    %v1297 = vunpack.c.l.b16 %v610
    %v1298 = vunpack.c.h.b16 %v610
    %v1299 = vunpack.c.l.b16 %v611
    %v1300 = vunpack.c.h.b16 %v611
    %v1301 = vunpack.c.l.b16 %v612
    %v1302 = vunpack.c.h.b16 %v612
    %v1303 = vunpack.c.l.b16 %v613
    %v1304 = vunpack.c.h.b16 %v613
    %v1305 = vunpack.c.l.b16 %v614
    %v1306 = vunpack.c.h.b16 %v614
    %v1307 = vunpack.c.l.b16 %v615
    %v1308 = vunpack.c.h.b16 %v615
    %v1309 = vunpack.c.l.b16 %v616
    %v1310 = vunpack.c.h.b16 %v616
    %v1311 = vunpack.c.l.b16 %v617
    %v1312 = vunpack.c.h.b16 %v617
    %v1313 = vunpack.c.l.b16 %v618
    %v1314 = vunpack.c.h.b16 %v618
    %v1315 = vunpack.c.l.b16 %v619
    %v1316 = vunpack.c.h.b16 %v619
    %v1317 = vunpack.c.l.b16 %v620
    %v1318 = vunpack.c.h.b16 %v620
    %v1319 = vunpack.c.l.b16 %v621
    %v1320 = vunpack.c.h.b16 %v621
    %v1321 = vunpack.c.l.b16 %v622
    %v1322 = vunpack.c.h.b16 %v622
    %v1323 = vunpack.c.l.b16 %v623
    %v1324 = vunpack.c.h.b16 %v623
    %v1325 = vunpack.c.l.b16 %v624
    %v1326 = vunpack.c.h.b16 %v624
    %v1327 = vunpack.c.l.b16 %v625
    %v1328 = vunpack.c.h.b16 %v625
    %v1329 = vunpack.c.l.b16 %v626
    %v1330 = vunpack.c.h.b16 %v626
    %v1331 = vunpack.c.l.b16 %v627
    %v1332 = vunpack.c.h.b16 %v627
    %v1333 = vunpack.c.l.b16 %v628
    %v1334 = vunpack.c.h.b16 %v628
    %v1335 = vunpack.c.l.b16 %v629
    %v1336 = vunpack.c.h.b16 %v629
    %v1337 = vunpack.c.l.b16 %v630
    %v1338 = vunpack.c.h.b16 %v630
    %v1339 = vunpack.c.l.b16 %v631
    %v1340 = vunpack.c.h.b16 %v631
    %v1341 = vunpack.c.l.b16 %v632
    %v1342 = vunpack.c.h.b16 %v632
    %v1343 = vunpack.c.l.b16 %v633
    %v1344 = vunpack.c.h.b16 %v633
    %v1345 = vunpack.c.l.b16 %v634
    %v1346 = vunpack.c.h.b16 %v634
    %v1347 = vunpack.c.l.b16 %v635
    %v1348 = vunpack.c.h.b16 %v635
    %v1349 = vunpack.c.l.b16 %v636
    %v1350 = vunpack.c.h.b16 %v636
    %v1351 = vunpack.c.l.b16 %v637
    %v1352 = vunpack.c.h.b16 %v637
    %v1353 = vunpack.c.l.b16 %v638
    %v1354 = vunpack.c.h.b16 %v638
    %v1355 = vunpack.c.l.b16 %v639
    %v1356 = vunpack.c.h.b16 %v639
    %v1357 = vunpack.c.l.b16 %v640
    %v1358 = vunpack.c.h.b16 %v640
    %v1359 = vunpack.c.l.b16 %v641
    %v1360 = vunpack.c.h.b16 %v641
    %v1361 = vunpack.c.l.b16 %v642
    %v1362 = vunpack.c.h.b16 %v642
    %v1363 = vunpack.c.l.b16 %v643
    %v1364 = vunpack.c.h.b16 %v643
    %v1365 = vunpack.c.l.b16 %v644
    %v1366 = vunpack.c.h.b16 %v644
    %v1367 = vunpack.c.l.b16 %v645
    %v1368 = vunpack.c.h.b16 %v645
    %v1369 = vunpack.c.l.b16 %v646
    %v1370 = vunpack.c.h.b16 %v646
    %v1371 = vunpack.c.l.b16 %v647
    %v1372 = vunpack.c.h.b16 %v647
    %v1373 = vunpack.c.l.b16 %v648
    %v1374 = vunpack.c.h.b16 %v648
    %v1375 = vunpack.c.l.b16 %v649
    %v1376 = vunpack.c.h.b16 %v649
    %v1377 = vunpack.c.l.b16 %v650
    %v1378 = vunpack.c.h.b16 %v650
    %v1379 = vunpack.c.l.b16 %v651
    %v1380 = vunpack.c.h.b16 %v651
    %v1381 = vunpack.c.l.b16 %v652
    %v1382 = vunpack.c.h.b16 %v652
    %v1383 = vunpack.c.l.b16 %v653
    %v1384 = vunpack.c.h.b16 %v653
    %v1385 = vunpack.c.l.b16 %v654
    %v1386 = vunpack.c.h.b16 %v654
    %v1387 = vunpack.c.l.b16 %v655
    %v1388 = vunpack.c.h.b16 %v655
    %v1389 = vunpack.c.l.b16 %v656
    %v1390 = vunpack.c.h.b16 %v656
    %v1391 = vunpack.c.l.b16 %v657
    %v1392 = vunpack.c.h.b16 %v657
    %v1393 = vunpack.c.l.b16 %v658
    %v1394 = vunpack.c.h.b16 %v658
    %v1395 = vunpack.c.l.b16 %v659
    %v1396 = vunpack.c.h.b16 %v659
    %v1397 = vunpack.c.l.b16 %v660
    %v1398 = vunpack.c.h.b16 %v660
    %v1399 = vunpack.c.l.b16 %v661
    %v1400 = vunpack.c.h.b16 %v661
    %v1401 = vunpack.c.l.b16 %v662
    %v1402 = vunpack.c.h.b16 %v662
    %v1403 = vunpack.c.l.b16 %v663
    %v1404 = vunpack.c.h.b16 %v663
    %v1405 = vunpack.c.l.b16 %v664
    %v1406 = vunpack.c.h.b16 %v664
    %v1407 = vunpack.c.l.b16 %v665
    %v1408 = vunpack.c.h.b16 %v665
    %v1409 = vunpack.c.l.b16 %v666
    %v1410 = vunpack.c.h.b16 %v666
    %v1411 = vunpack.c.l.b16 %v667
    %v1412 = vunpack.c.h.b16 %v667
    %v1413 = vunpack.c.l.b16 %v668
    %v1414 = vunpack.c.h.b16 %v668
    %v1415 = vunpack.c.l.b16 %v669
    %v1416 = vunpack.c.h.b16 %v669
    %v1417 = vunpack.c.l.b16 %v670
    %v1418 = vunpack.c.h.b16 %v670
    %v1419 = vunpack.c.l.b16 %v671
    %v1420 = vunpack.c.h.b16 %v671
    %v1421 = vunpack.c.l.b16 %v672
    %v1422 = vunpack.c.h.b16 %v672
    %v1423 = vunpack.c.l.b16 %v673
    %v1424 = vunpack.c.h.b16 %v673
    %v1425 = vunpack.c.l.b16 %v674
    %v1426 = vunpack.c.h.b16 %v674
    %v1427 = vunpack.c.l.b16 %v675
    %v1428 = vunpack.c.h.b16 %v675
    %v1429 = vunpack.c.l.b16 %v676
    %v1430 = vunpack.c.h.b16 %v676
    %v1431 = vunpack.c.l.b16 %v677
    %v1432 = vunpack.c.h.b16 %v677
    %v1433 = vunpack.c.l.b16 %v678
    %v1434 = vunpack.c.h.b16 %v678
    %v1435 = vunpack.c.l.b16 %v679
    %v1436 = vunpack.c.h.b16 %v679
    %v1437 = vunpack.c.l.b16 %v680
    %v1438 = vunpack.c.h.b16 %v680
    %v1439 = vunpack.c.l.b16 %v681
    %v1440 = vunpack.c.h.b16 %v681
    %v1441 = vunpack.c.l.b16 %v682
    %v1442 = vunpack.c.h.b16 %v682
    %v1443 = vunpack.c.l.b16 %v683
    %v1444 = vunpack.c.h.b16 %v683
    %v1445 = vunpack.c.l.b16 %v684
    %v1446 = vunpack.c.h.b16 %v684
    %v1447 = vunpack.c.l.b16 %v685
    %v1448 = vunpack.c.h.b16 %v685
    %v1449 = vunpack.c.l.b16 %v686
    %v1450 = vunpack.c.h.b16 %v686
    %v1451 = vunpack.c.l.b16 %v687
    %v1452 = vunpack.c.h.b16 %v687
    %v1453 = vunpack.c.l.b16 %v688
    %v1454 = vunpack.c.h.b16 %v688
    %v1455 = vunpack.c.l.b16 %v689
    %v1456 = vunpack.c.h.b16 %v689
    %v1457 = vunpack.c.l.b16 %v690
    %v1458 = vunpack.c.h.b16 %v690
    %v1459 = vunpack.c.l.b16 %v691
    %v1460 = vunpack.c.h.b16 %v691
    %v1461 = vunpack.c.l.b16 %v692
    %v1462 = vunpack.c.h.b16 %v692
    %v1463 = vunpack.c.l.b16 %v693
    %v1464 = vunpack.c.h.b16 %v693
    %v1465 = vunpack.c.l.b16 %v694
    %v1466 = vunpack.c.h.b16 %v694
    %v1467 = vunpack.c.l.b16 %v695
    %v1468 = vunpack.c.h.b16 %v695
    %v1469 = vunpack.c.l.b16 %v696
    %v1470 = vunpack.c.h.b16 %v696
    %v1471 = vunpack.c.l.b16 %v697
    %v1472 = vunpack.c.h.b16 %v697
    %v1473 = vunpack.c.l.b16 %v698
    %v1474 = vunpack.c.h.b16 %v698
    %v1475 = vunpack.c.l.b16 %v699
    %v1476 = vunpack.c.h.b16 %v699
    %v1477 = vunpack.c.l.b16 %v700
    %v1478 = vunpack.c.h.b16 %v700
    %v1479 = vunpack.c.l.b16 %v701
    %v1480 = vunpack.c.h.b16 %v701
    %v1481 = vunpack.c.l.b16 %v702
    %v1482 = vunpack.c.h.b16 %v702
    %v1483 = vunpack.c.l.b16 %v703
    %v1484 = vunpack.c.h.b16 %v703
    %v1485 = vunpack.c.l.b16 %v704
    %v1486 = vunpack.c.h.b16 %v704
    %v1487 = vunpack.c.l.b16 %v705
    %v1488 = vunpack.c.h.b16 %v705
    %v1489 = vunpack.c.l.b16 %v706
    %v1490 = vunpack.c.h.b16 %v706
    %v1491 = vunpack.c.l.b16 %v707
    %v1492 = vunpack.c.h.b16 %v707
    %v1493 = vunpack.c.l.b16 %v708
    %v1494 = vunpack.c.h.b16 %v708
    %v1495 = vunpack.c.l.b16 %v709
    %v1496 = vunpack.c.h.b16 %v709
    %v1497 = vunpack.c.l.b16 %v710
    %v1498 = vunpack.c.h.b16 %v710
    %v1499 = vunpack.c.l.b16 %v711
    %v1500 = vunpack.c.h.b16 %v711
    %v1501 = vunpack.c.l.b16 %v712
    %v1502 = vunpack.c.h.b16 %v712
    %v1503 = vpack.c.b16 %v995, %v991
    %v1504 = vpack.c.b16 %v996, %v992
    %v1505 = vpack.c.b16 %v997, %v993
    %v1506 = vpack.c.b16 %v998, %v994
    %v1507 = vpack.c.b16 %v1003, %v999
    %v1508 = vpack.c.b16 %v1004, %v1000
    %v1509 = vpack.c.b16 %v1005, %v1001
    %v1510 = vpack.c.b16 %v1006, %v1002
    %v1511 = vpack.c.b16 %v1011, %v1007
    %v1512 = vpack.c.b16 %v1012, %v1008
    %v1513 = vpack.c.b16 %v1013, %v1009
    %v1514 = vpack.c.b16 %v1014, %v1010
    %v1515 = vpack.c.b16 %v1019, %v1015
    %v1516 = vpack.c.b16 %v1020, %v1016
    %v1517 = vpack.c.b16 %v1021, %v1017
    %v1518 = vpack.c.b16 %v1022, %v1018
    %v1519 = vpack.c.b16 %v1027, %v1023
    %v1520 = vpack.c.b16 %v1028, %v1024
    %v1521 = vpack.c.b16 %v1029, %v1025
    %v1522 = vpack.c.b16 %v1030, %v1026
    %v1523 = vpack.c.b16 %v1035, %v1031
    %v1524 = vpack.c.b16 %v1036, %v1032
    %v1525 = vpack.c.b16 %v1037, %v1033
    %v1526 = vpack.c.b16 %v1038, %v1034
    %v1527 = vpack.c.b16 %v1043, %v1039
    %v1528 = vpack.c.b16 %v1044, %v1040
    %v1529 = vpack.c.b16 %v1045, %v1041
    %v1530 = vpack.c.b16 %v1046, %v1042
    %v1531 = vpack.c.b16 %v1051, %v1047
    %v1532 = vpack.c.b16 %v1052, %v1048
    %v1533 = vpack.c.b16 %v1053, %v1049
    %v1534 = vpack.c.b16 %v1054, %v1050
    %v1535 = vpack.c.b16 %v1059, %v1055
    %v1536 = vpack.c.b16 %v1060, %v1056
    %v1537 = vpack.c.b16 %v1061, %v1057
    %v1538 = vpack.c.b16 %v1062, %v1058
    %v1539 = vpack.c.b16 %v1067, %v1063
    %v1540 = vpack.c.b16 %v1068, %v1064
    %v1541 = vpack.c.b16 %v1069, %v1065
    %v1542 = vpack.c.b16 %v1070, %v1066
    %v1543 = vpack.c.b16 %v1075, %v1071
    %v1544 = vpack.c.b16 %v1076, %v1072
    %v1545 = vpack.c.b16 %v1077, %v1073
    %v1546 = vpack.c.b16 %v1078, %v1074
    %v1547 = vpack.c.b16 %v1083, %v1079
    %v1548 = vpack.c.b16 %v1084, %v1080
    %v1549 = vpack.c.b16 %v1085, %v1081
    %v1550 = vpack.c.b16 %v1086, %v1082
    %v1551 = vpack.c.b16 %v1091, %v1087
    %v1552 = vpack.c.b16 %v1092, %v1088
    %v1553 = vpack.c.b16 %v1093, %v1089
    %v1554 = vpack.c.b16 %v1094, %v1090
    %v1555 = vpack.c.b16 %v1099, %v1095
    %v1556 = vpack.c.b16 %v1100, %v1096
    %v1557 = vpack.c.b16 %v1101, %v1097
    %v1558 = vpack.c.b16 %v1102, %v1098
    %v1559 = vpack.c.b16 %v1107, %v1103
    %v1560 = vpack.c.b16 %v1108, %v1104
    %v1561 = vpack.c.b16 %v1109, %v1105
    %v1562 = vpack.c.b16 %v1110, %v1106
    %v1563 = vpack.c.b16 %v1115, %v1111
    %v1564 = vpack.c.b16 %v1116, %v1112
    %v1565 = vpack.c.b16 %v1117, %v1113
    %v1566 = vpack.c.b16 %v1118, %v1114
    %v1567 = vpack.c.b16 %v1123, %v1119
    %v1568 = vpack.c.b16 %v1124, %v1120
    %v1569 = vpack.c.b16 %v1125, %v1121
    %v1570 = vpack.c.b16 %v1126, %v1122
    %v1571 = vpack.c.b16 %v1131, %v1127
    %v1572 = vpack.c.b16 %v1132, %v1128
    %v1573 = vpack.c.b16 %v1133, %v1129
    %v1574 = vpack.c.b16 %v1134, %v1130
    %v1575 = vpack.c.b16 %v1139, %v1135
    %v1576 = vpack.c.b16 %v1140, %v1136
    %v1577 = vpack.c.b16 %v1141, %v1137
    %v1578 = vpack.c.b16 %v1142, %v1138
    %v1579 = vpack.c.b16 %v1147, %v1143
    %v1580 = vpack.c.b16 %v1148, %v1144
    %v1581 = vpack.c.b16 %v1149, %v1145
    %v1582 = vpack.c.b16 %v1150, %v1146
    %v1583 = vpack.c.b16 %v1155, %v1151
    %v1584 = vpack.c.b16 %v1156, %v1152
    %v1585 = vpack.c.b16 %v1157, %v1153
    %v1586 = vpack.c.b16 %v1158, %v1154
    %v1587 = vpack.c.b16 %v1163, %v1159
    %v1588 = vpack.c.b16 %v1164, %v1160
    %v1589 = vpack.c.b16 %v1165, %v1161
    %v1590 = vpack.c.b16 %v1166, %v1162
    %v1591 = vpack.c.b16 %v1171, %v1167
    %v1592 = vpack.c.b16 %v1172, %v1168
    %v1593 = vpack.c.b16 %v1173, %v1169
    %v1594 = vpack.c.b16 %v1174, %v1170
    %v1595 = vpack.c.b16 %v1179, %v1175
    %v1596 = vpack.c.b16 %v1180, %v1176
    %v1597 = vpack.c.b16 %v1181, %v1177
    %v1598 = vpack.c.b16 %v1182, %v1178
    %v1599 = vpack.c.b16 %v1187, %v1183
    %v1600 = vpack.c.b16 %v1188, %v1184
    %v1601 = vpack.c.b16 %v1189, %v1185
    %v1602 = vpack.c.b16 %v1190, %v1186
    %v1603 = vpack.c.b16 %v1195, %v1191
    %v1604 = vpack.c.b16 %v1196, %v1192
    %v1605 = vpack.c.b16 %v1197, %v1193
    %v1606 = vpack.c.b16 %v1198, %v1194
    %v1607 = vpack.c.b16 %v1203, %v1199
    %v1608 = vpack.c.b16 %v1204, %v1200
    %v1609 = vpack.c.b16 %v1205, %v1201
    %v1610 = vpack.c.b16 %v1206, %v1202
    %v1611 = vpack.c.b16 %v1211, %v1207
    %v1612 = vpack.c.b16 %v1212, %v1208
    %v1613 = vpack.c.b16 %v1213, %v1209
    %v1614 = vpack.c.b16 %v1214, %v1210
    %v1615 = vpack.c.b16 %v1219, %v1215
    %v1616 = vpack.c.b16 %v1220, %v1216
    %v1617 = vpack.c.b16 %v1221, %v1217
    %v1618 = vpack.c.b16 %v1222, %v1218
    %v1619 = vpack.c.b16 %v1227, %v1223
    %v1620 = vpack.c.b16 %v1228, %v1224
    %v1621 = vpack.c.b16 %v1229, %v1225
    %v1622 = vpack.c.b16 %v1230, %v1226
    %v1623 = vpack.c.b16 %v1235, %v1231
    %v1624 = vpack.c.b16 %v1236, %v1232
    %v1625 = vpack.c.b16 %v1237, %v1233
    %v1626 = vpack.c.b16 %v1238, %v1234
    %v1627 = vpack.c.b16 %v1243, %v1239
    %v1628 = vpack.c.b16 %v1244, %v1240
    %v1629 = vpack.c.b16 %v1245, %v1241
    %v1630 = vpack.c.b16 %v1246, %v1242
    %v1631 = vpack.c.b16 %v1251, %v1247
    %v1632 = vpack.c.b16 %v1252, %v1248
    %v1633 = vpack.c.b16 %v1253, %v1249
    %v1634 = vpack.c.b16 %v1254, %v1250
    %v1635 = vpack.c.b16 %v1259, %v1255
    %v1636 = vpack.c.b16 %v1260, %v1256
    %v1637 = vpack.c.b16 %v1261, %v1257
    %v1638 = vpack.c.b16 %v1262, %v1258
    %v1639 = vpack.c.b16 %v1267, %v1263
    %v1640 = vpack.c.b16 %v1268, %v1264
    %v1641 = vpack.c.b16 %v1269, %v1265
    %v1642 = vpack.c.b16 %v1270, %v1266
    %v1643 = vpack.c.b16 %v1275, %v1271
    %v1644 = vpack.c.b16 %v1276, %v1272
    %v1645 = vpack.c.b16 %v1277, %v1273
    %v1646 = vpack.c.b16 %v1278, %v1274
    %v1647 = vpack.c.b16 %v1283, %v1279
    %v1648 = vpack.c.b16 %v1284, %v1280
    %v1649 = vpack.c.b16 %v1285, %v1281
    %v1650 = vpack.c.b16 %v1286, %v1282
    %v1651 = vpack.c.b16 %v1291, %v1287
    %v1652 = vpack.c.b16 %v1292, %v1288
    %v1653 = vpack.c.b16 %v1293, %v1289
    %v1654 = vpack.c.b16 %v1294, %v1290
    %v1655 = vpack.c.b16 %v1299, %v1295
    %v1656 = vpack.c.b16 %v1300, %v1296
    %v1657 = vpack.c.b16 %v1301, %v1297
    %v1658 = vpack.c.b16 %v1302, %v1298
    %v1659 = vpack.c.b16 %v1307, %v1303
    %v1660 = vpack.c.b16 %v1308, %v1304
    %v1661 = vpack.c.b16 %v1309, %v1305
    %v1662 = vpack.c.b16 %v1310, %v1306
    %v1663 = vpack.c.b16 %v1315, %v1311
    %v1664 = vpack.c.b16 %v1316, %v1312
    %v1665 = vpack.c.b16 %v1317, %v1313
    %v1666 = vpack.c.b16 %v1318, %v1314
    %v1667 = vpack.c.b16 %v1323, %v1319
    %v1668 = vpack.c.b16 %v1324, %v1320
    %v1669 = vpack.c.b16 %v1325, %v1321
    %v1670 = vpack.c.b16 %v1326, %v1322
    %v1671 = vpack.c.b16 %v1331, %v1327
    %v1672 = vpack.c.b16 %v1332, %v1328
    %v1673 = vpack.c.b16 %v1333, %v1329
    %v1674 = vpack.c.b16 %v1334, %v1330
    %v1675 = vpack.c.b16 %v1339, %v1335
    %v1676 = vpack.c.b16 %v1340, %v1336
    %v1677 = vpack.c.b16 %v1341, %v1337
    %v1678 = vpack.c.b16 %v1342, %v1338
    %v1679 = vpack.c.b16 %v1347, %v1343
    %v1680 = vpack.c.b16 %v1348, %v1344
    %v1681 = vpack.c.b16 %v1349, %v1345
    %v1682 = vpack.c.b16 %v1350, %v1346
    %v1683 = vpack.c.b16 %v1355, %v1351
    %v1684 = vpack.c.b16 %v1356, %v1352
    %v1685 = vpack.c.b16 %v1357, %v1353
    %v1686 = vpack.c.b16 %v1358, %v1354
    %v1687 = vpack.c.b16 %v1363, %v1359
    %v1688 = vpack.c.b16 %v1364, %v1360
    %v1689 = vpack.c.b16 %v1365, %v1361
    %v1690 = vpack.c.b16 %v1366, %v1362
    %v1691 = vpack.c.b16 %v1371, %v1367
    %v1692 = vpack.c.b16 %v1372, %v1368
    %v1693 = vpack.c.b16 %v1373, %v1369
    %v1694 = vpack.c.b16 %v1374, %v1370
    %v1695 = vpack.c.b16 %v1379, %v1375
    %v1696 = vpack.c.b16 %v1380, %v1376
    %v1697 = vpack.c.b16 %v1381, %v1377
    %v1698 = vpack.c.b16 %v1382, %v1378
    %v1699 = vpack.c.b16 %v1387, %v1383
    %v1700 = vpack.c.b16 %v1388, %v1384
    %v1701 = vpack.c.b16 %v1389, %v1385
    %v1702 = vpack.c.b16 %v1390, %v1386
    %v1703 = vpack.c.b16 %v1395, %v1391
    %v1704 = vpack.c.b16 %v1396, %v1392
    %v1705 = vpack.c.b16 %v1397, %v1393
    %v1706 = vpack.c.b16 %v1398, %v1394
    %v1707 = vpack.c.b16 %v1403, %v1399
    %v1708 = vpack.c.b16 %v1404, %v1400
    %v1709 = vpack.c.b16 %v1405, %v1401
    %v1710 = vpack.c.b16 %v1406, %v1402
    %v1711 = vpack.c.b16 %v1411, %v1407
    %v1712 = vpack.c.b16 %v1412, %v1408
    %v1713 = vpack.c.b16 %v1413, %v1409
    %v1714 = vpack.c.b16 %v1414, %v1410
    %v1715 = vpack.c.b16 %v1419, %v1415
    %v1716 = vpack.c.b16 %v1420, %v1416
    %v1717 = vpack.c.b16 %v1421, %v1417
    %v1718 = vpack.c.b16 %v1422, %v1418
    %v1719 = vpack.c.b16 %v1427, %v1423
    %v1720 = vpack.c.b16 %v1428, %v1424
    %v1721 = vpack.c.b16 %v1429, %v1425
    %v1722 = vpack.c.b16 %v1430, %v1426
    %v1723 = vpack.c.b16 %v1435, %v1431
    %v1724 = vpack.c.b16 %v1436, %v1432
    %v1725 = vpack.c.b16 %v1437, %v1433
    %v1726 = vpack.c.b16 %v1438, %v1434
    %v1727 = vpack.c.b16 %v1443, %v1439
    %v1728 = vpack.c.b16 %v1444, %v1440
    %v1729 = vpack.c.b16 %v1445, %v1441
    %v1730 = vpack.c.b16 %v1446, %v1442
    %v1731 = vpack.c.b16 %v1451, %v1447
    %v1732 = vpack.c.b16 %v1452, %v1448
    %v1733 = vpack.c.b16 %v1453, %v1449
    %v1734 = vpack.c.b16 %v1454, %v1450
    %v1735 = vpack.c.b16 %v1459, %v1455
    %v1736 = vpack.c.b16 %v1460, %v1456
    %v1737 = vpack.c.b16 %v1461, %v1457
    %v1738 = vpack.c.b16 %v1462, %v1458
    %v1739 = vpack.c.b16 %v1467, %v1463
    %v1740 = vpack.c.b16 %v1468, %v1464
    %v1741 = vpack.c.b16 %v1469, %v1465
    %v1742 = vpack.c.b16 %v1470, %v1466
    %v1743 = vpack.c.b16 %v1475, %v1471
    %v1744 = vpack.c.b16 %v1476, %v1472
    %v1745 = vpack.c.b16 %v1477, %v1473
    %v1746 = vpack.c.b16 %v1478, %v1474
    %v1747 = vpack.c.b16 %v1483, %v1479
    %v1748 = vpack.c.b16 %v1484, %v1480
    %v1749 = vpack.c.b16 %v1485, %v1481
    %v1750 = vpack.c.b16 %v1486, %v1482
    %v1751 = vpack.c.b16 %v1491, %v1487
    %v1752 = vpack.c.b16 %v1492, %v1488
    %v1753 = vpack.c.b16 %v1493, %v1489
    %v1754 = vpack.c.b16 %v1494, %v1490
    %v1755 = vpack.c.b16 %v1499, %v1495
    %v1756 = vpack.c.b16 %v1500, %v1496
    %v1757 = vpack.c.b16 %v1501, %v1497
    %v1758 = vpack.c.b16 %v1502, %v1498
    %2015 = vmatprep.subr.bf16.mxu0 %v1504
    %2016 = vmatpush1.bf16.msra.mxu0 %v1503
    %2017 = vmatprep.subr.bf16.mxu0 %v1508
    %2018 = vmatpush1.bf16.msra.mxu0 %v1507
    %2019 = vmatprep.subr.bf16.mxu0 %v1512
    %2020 = vmatpush1.bf16.msra.mxu0 %v1511
    %2021 = vmatprep.subr.bf16.mxu0 %v1516
    %2022 = vmatpush1.bf16.msra.mxu0 %v1515
    %2023 = vmatprep.subr.bf16.mxu0 %v1520
    %2024 = vmatpush1.bf16.msra.mxu0 %v1519
    %2025 = vmatprep.subr.bf16.mxu0 %v1524
    %2026 = vmatpush1.bf16.msra.mxu0 %v1523
    %2027 = vmatprep.subr.bf16.mxu0 %v1528
    %2028 = vmatpush1.bf16.msra.mxu0 %v1527
    %2029 = vmatprep.subr.bf16.mxu0 %v1532
    %2030 = vmatpush1.bf16.msra.mxu0 %v1531
    %2031 = vmatprep.subr.bf16.mxu0 %v1536
    %2032 = vmatpush1.bf16.msra.mxu0 %v1535
    %2033 = vmatprep.subr.bf16.mxu0 %v1540
    %2034 = vmatpush1.bf16.msra.mxu0 %v1539
    %2035 = vmatprep.subr.bf16.mxu0 %v1544
    %2036 = vmatpush1.bf16.msra.mxu0 %v1543
    %2037 = vmatprep.subr.bf16.mxu0 %v1548
    %2038 = vmatpush1.bf16.msra.mxu0 %v1547
    %2039 = vmatprep.subr.bf16.mxu0 %v1552
    %2040 = vmatpush1.bf16.msra.mxu0 %v1551
    %2041 = vmatprep.subr.bf16.mxu0 %v1556
    %2042 = vmatpush1.bf16.msra.mxu0 %v1555
    %2043 = vmatprep.subr.bf16.mxu0 %v1560
    %2044 = vmatpush1.bf16.msra.mxu0 %v1559
    %2045 = vmatprep.subr.bf16.mxu0 %v1564
    %2046 = vmatpush1.bf16.msra.mxu0 %v1563
    %2047 = vmatprep.mubr.bf16.mxu0 %v450
    %2048 = vmatmul.mubr.bf16.gmra.mrb[0].mxu0 %v449
    %v2049 = vpop.f32.mrb[0].mxu0
    %v2050 = vadd.f32 %v718, %v2049
    %v2051 = vpop.f32.mrb[0].mxu0
    %v2052 = vadd.f32 %v722, %v2051
    %v2053 = vpop.f32.mrb[0].mxu0
    %v2054 = vpop.f32.mrb[0].mxu0
    %2055 = vdwg.mxu0
    %2056 = vmatprep.subr.bf16.mxu0 %v1568
    %2057 = vmatpush1.bf16.msra.mxu0 %v1567
    %2058 = vmatprep.subr.bf16.mxu0 %v1572
    %2059 = vmatpush1.bf16.msra.mxu0 %v1571
    %2060 = vmatprep.subr.bf16.mxu0 %v1576
    %2061 = vmatpush1.bf16.msra.mxu0 %v1575
    %2062 = vmatprep.subr.bf16.mxu0 %v1580
    %2063 = vmatpush1.bf16.msra.mxu0 %v1579
    %2064 = vmatprep.subr.bf16.mxu0 %v1584
    %2065 = vmatpush1.bf16.msra.mxu0 %v1583
    %2066 = vmatprep.subr.bf16.mxu0 %v1588
    %2067 = vmatpush1.bf16.msra.mxu0 %v1587
    %2068 = vmatprep.subr.bf16.mxu0 %v1592
    %2069 = vmatpush1.bf16.msra.mxu0 %v1591
    %2070 = vmatprep.subr.bf16.mxu0 %v1596
    %2071 = vmatpush1.bf16.msra.mxu0 %v1595
    %2072 = vmatprep.subr.bf16.mxu0 %v1600
    %2073 = vmatpush1.bf16.msra.mxu0 %v1599
    %2074 = vmatprep.subr.bf16.mxu0 %v1604
    %2075 = vmatpush1.bf16.msra.mxu0 %v1603
    %2076 = vmatprep.subr.bf16.mxu0 %v1608
    %2077 = vmatpush1.bf16.msra.mxu0 %v1607
    %2078 = vmatprep.subr.bf16.mxu0 %v1612
    %2079 = vmatpush1.bf16.msra.mxu0 %v1611
    %2080 = vmatprep.subr.bf16.mxu0 %v1616
    %2081 = vmatpush1.bf16.msra.mxu0 %v1615
    %2082 = vmatprep.subr.bf16.mxu0 %v1620
    %2083 = vmatpush1.bf16.msra.mxu0 %v1619
    %2084 = vmatprep.subr.bf16.mxu0 %v1624
    %2085 = vmatpush1.bf16.msra.mxu0 %v1623
    %2086 = vmatprep.subr.bf16.mxu0 %v1628
    %2087 = vmatpush1.bf16.msra.mxu0 %v1627
    %2088 = vmatprep.mubr.bf16.mxu0 %v452
    %2089 = vmatmul.mubr.bf16.gmra.mrb[0].mxu0 %v451
    %v2090 = vpop.f32.mrb[0].mxu0
    %v2091 = vadd.f32 %v2050, %v2090
    %v2092 = vpop.f32.mrb[0].mxu0
    %v2093 = vadd.f32 %v2052, %v2092
    %v2094 = vpop.f32.mrb[0].mxu0
    %v2095 = vpop.f32.mrb[0].mxu0
    %2096 = vdwg.mxu0
    %2097 = vmatprep.subr.bf16.mxu0 %v1632
    %2098 = vmatpush1.bf16.msra.mxu0 %v1631
    %2099 = vmatprep.subr.bf16.mxu0 %v1636
    %2100 = vmatpush1.bf16.msra.mxu0 %v1635
    %2101 = vmatprep.subr.bf16.mxu0 %v1640
    %2102 = vmatpush1.bf16.msra.mxu0 %v1639
    %2103 = vmatprep.subr.bf16.mxu0 %v1644
    %2104 = vmatpush1.bf16.msra.mxu0 %v1643
    %2105 = vmatprep.subr.bf16.mxu0 %v1648
    %2106 = vmatpush1.bf16.msra.mxu0 %v1647
    %2107 = vmatprep.subr.bf16.mxu0 %v1652
    %2108 = vmatpush1.bf16.msra.mxu0 %v1651
    %2109 = vmatprep.subr.bf16.mxu0 %v1656
    %2110 = vmatpush1.bf16.msra.mxu0 %v1655
    %2111 = vmatprep.subr.bf16.mxu0 %v1660
    %2112 = vmatpush1.bf16.msra.mxu0 %v1659
    %2113 = vmatprep.subr.bf16.mxu0 %v1664
    %2114 = vmatpush1.bf16.msra.mxu0 %v1663
    %2115 = vmatprep.subr.bf16.mxu0 %v1668
    %2116 = vmatpush1.bf16.msra.mxu0 %v1667
    %2117 = vmatprep.subr.bf16.mxu0 %v1672
    %2118 = vmatpush1.bf16.msra.mxu0 %v1671
    %2119 = vmatprep.subr.bf16.mxu0 %v1676
    %2120 = vmatpush1.bf16.msra.mxu0 %v1675
    %2121 = vmatprep.subr.bf16.mxu0 %v1680
    %2122 = vmatpush1.bf16.msra.mxu0 %v1679
    %2123 = vmatprep.subr.bf16.mxu0 %v1684
    %2124 = vmatpush1.bf16.msra.mxu0 %v1683
    %2125 = vmatprep.subr.bf16.mxu0 %v1688
    %2126 = vmatpush1.bf16.msra.mxu0 %v1687
    %2127 = vmatprep.subr.bf16.mxu0 %v1692
    %2128 = vmatpush1.bf16.msra.mxu0 %v1691
    %2129 = vmatprep.mubr.bf16.mxu0 %v454
    %2130 = vmatmul.mubr.bf16.gmra.mrb[0].mxu0 %v453
    %v2131 = vpop.f32.mrb[0].mxu0
    %v2132 = vadd.f32 %v2091, %v2131
    %v2133 = vpop.f32.mrb[0].mxu0
    %v2134 = vadd.f32 %v2093, %v2133
    %v2135 = vpop.f32.mrb[0].mxu0
    %v2136 = vpop.f32.mrb[0].mxu0
    %2137 = vdwg.mxu0
    %2138 = vmatprep.subr.bf16.mxu0 %v1696
    %2139 = vmatpush1.bf16.msra.mxu0 %v1695
    %2140 = vmatprep.subr.bf16.mxu0 %v1700
    %2141 = vmatpush1.bf16.msra.mxu0 %v1699
    %2142 = vmatprep.subr.bf16.mxu0 %v1704
    %2143 = vmatpush1.bf16.msra.mxu0 %v1703
    %2144 = vmatprep.subr.bf16.mxu0 %v1708
    %2145 = vmatpush1.bf16.msra.mxu0 %v1707
    %2146 = vmatprep.subr.bf16.mxu0 %v1712
    %2147 = vmatpush1.bf16.msra.mxu0 %v1711
    %2148 = vmatprep.subr.bf16.mxu0 %v1716
    %2149 = vmatpush1.bf16.msra.mxu0 %v1715
    %2150 = vmatprep.subr.bf16.mxu0 %v1720
    %2151 = vmatpush1.bf16.msra.mxu0 %v1719
    %2152 = vmatprep.subr.bf16.mxu0 %v1724
    %2153 = vmatpush1.bf16.msra.mxu0 %v1723
    %2154 = vmatprep.subr.bf16.mxu0 %v1728
    %2155 = vmatpush1.bf16.msra.mxu0 %v1727
    %2156 = vmatprep.subr.bf16.mxu0 %v1732
    %2157 = vmatpush1.bf16.msra.mxu0 %v1731
    %2158 = vmatprep.subr.bf16.mxu0 %v1736
    %2159 = vmatpush1.bf16.msra.mxu0 %v1735
    %2160 = vmatprep.subr.bf16.mxu0 %v1740
    %2161 = vmatpush1.bf16.msra.mxu0 %v1739
    %2162 = vmatprep.subr.bf16.mxu0 %v1744
    %2163 = vmatpush1.bf16.msra.mxu0 %v1743
    %2164 = vmatprep.subr.bf16.mxu0 %v1748
    %2165 = vmatpush1.bf16.msra.mxu0 %v1747
    %2166 = vmatprep.subr.bf16.mxu0 %v1752
    %2167 = vmatpush1.bf16.msra.mxu0 %v1751
    %2168 = vmatprep.subr.bf16.mxu0 %v1756
    %2169 = vmatpush1.bf16.msra.mxu0 %v1755
    %2170 = vmatprep.mubr.bf16.mxu0 %v456
    %2171 = vmatmul.mubr.bf16.gmra.mrb[0].mxu0 %v455
    %v2172 = vpop.f32.mrb[0].mxu0
    %v2173 = vadd.f32 %v2132, %v2172
    %v2174 = vpop.f32.mrb[0].mxu0
    %v2175 = vadd.f32 %v2134, %v2174
    %v2176 = vpop.f32.mrb[0].mxu0
    %v2177 = vpop.f32.mrb[0].mxu0
    %2178 = vdwg.mxu0
    %2179 = vmatprep.subr.bf16.mxu0 %v1506
    %2180 = vmatpush1.bf16.msra.mxu0 %v1505
    %2181 = vmatprep.subr.bf16.mxu0 %v1510
    %2182 = vmatpush1.bf16.msra.mxu0 %v1509
    %2183 = vmatprep.subr.bf16.mxu0 %v1514
    %2184 = vmatpush1.bf16.msra.mxu0 %v1513
    %2185 = vmatprep.subr.bf16.mxu0 %v1518
    %2186 = vmatpush1.bf16.msra.mxu0 %v1517
    %2187 = vmatprep.subr.bf16.mxu0 %v1522
    %2188 = vmatpush1.bf16.msra.mxu0 %v1521
    %2189 = vmatprep.subr.bf16.mxu0 %v1526
    %2190 = vmatpush1.bf16.msra.mxu0 %v1525
    %2191 = vmatprep.subr.bf16.mxu0 %v1530
    %2192 = vmatpush1.bf16.msra.mxu0 %v1529
    %2193 = vmatprep.subr.bf16.mxu0 %v1534
    %2194 = vmatpush1.bf16.msra.mxu0 %v1533
    %2195 = vmatprep.subr.bf16.mxu0 %v1538
    %2196 = vmatpush1.bf16.msra.mxu0 %v1537
    %2197 = vmatprep.subr.bf16.mxu0 %v1542
    %2198 = vmatpush1.bf16.msra.mxu0 %v1541
    %2199 = vmatprep.subr.bf16.mxu0 %v1546
    %2200 = vmatpush1.bf16.msra.mxu0 %v1545
    %2201 = vmatprep.subr.bf16.mxu0 %v1550
    %2202 = vmatpush1.bf16.msra.mxu0 %v1549
    %2203 = vmatprep.subr.bf16.mxu0 %v1554
    %2204 = vmatpush1.bf16.msra.mxu0 %v1553
    %2205 = vmatprep.subr.bf16.mxu0 %v1558
    %2206 = vmatpush1.bf16.msra.mxu0 %v1557
    %2207 = vmatprep.subr.bf16.mxu0 %v1562
    %2208 = vmatpush1.bf16.msra.mxu0 %v1561
    %2209 = vmatprep.subr.bf16.mxu0 %v1566
    %2210 = vmatpush1.bf16.msra.mxu0 %v1565
    %2211 = vmatprep.mubr.bf16.mxu0 %v450
    %2212 = vmatmul.mubr.bf16.gmra.mrb[0].mxu0 %v449
    %v2213 = vpop.f32.mrb[0].mxu0
    %v2214 = vadd.f32 %v726, %v2213
    %v2215 = vpop.f32.mrb[0].mxu0
    %v2216 = vadd.f32 %v730, %v2215
    %v2217 = vpop.f32.mrb[0].mxu0
    %v2218 = vpop.f32.mrb[0].mxu0
    %2219 = vdwg.mxu0
    %2220 = vmatprep.subr.bf16.mxu0 %v1570
    %2221 = vmatpush1.bf16.msra.mxu0 %v1569
    %2222 = vmatprep.subr.bf16.mxu0 %v1574
    %2223 = vmatpush1.bf16.msra.mxu0 %v1573
    %2224 = vmatprep.subr.bf16.mxu0 %v1578
    %2225 = vmatpush1.bf16.msra.mxu0 %v1577
    %2226 = vmatprep.subr.bf16.mxu0 %v1582
    %2227 = vmatpush1.bf16.msra.mxu0 %v1581
    %2228 = vmatprep.subr.bf16.mxu0 %v1586
    %2229 = vmatpush1.bf16.msra.mxu0 %v1585
    %2230 = vmatprep.subr.bf16.mxu0 %v1590
    %2231 = vmatpush1.bf16.msra.mxu0 %v1589
    %2232 = vmatprep.subr.bf16.mxu0 %v1594
    %2233 = vmatpush1.bf16.msra.mxu0 %v1593
    %2234 = vmatprep.subr.bf16.mxu0 %v1598
    %2235 = vmatpush1.bf16.msra.mxu0 %v1597
    %2236 = vmatprep.subr.bf16.mxu0 %v1602
    %2237 = vmatpush1.bf16.msra.mxu0 %v1601
    %2238 = vmatprep.subr.bf16.mxu0 %v1606
    %2239 = vmatpush1.bf16.msra.mxu0 %v1605
    %2240 = vmatprep.subr.bf16.mxu0 %v1610
    %2241 = vmatpush1.bf16.msra.mxu0 %v1609
    %2242 = vmatprep.subr.bf16.mxu0 %v1614
    %2243 = vmatpush1.bf16.msra.mxu0 %v1613
    %2244 = vmatprep.subr.bf16.mxu0 %v1618
    %2245 = vmatpush1.bf16.msra.mxu0 %v1617
    %2246 = vmatprep.subr.bf16.mxu0 %v1622
    %2247 = vmatpush1.bf16.msra.mxu0 %v1621
    %2248 = vmatprep.subr.bf16.mxu0 %v1626
    %2249 = vmatpush1.bf16.msra.mxu0 %v1625
    %2250 = vmatprep.subr.bf16.mxu0 %v1630
    %2251 = vmatpush1.bf16.msra.mxu0 %v1629
    %2252 = vmatprep.mubr.bf16.mxu0 %v452
    %2253 = vmatmul.mubr.bf16.gmra.mrb[0].mxu0 %v451
    %v2254 = vpop.f32.mrb[0].mxu0
    %v2255 = vadd.f32 %v2214, %v2254
    %v2256 = vpop.f32.mrb[0].mxu0
    %v2257 = vadd.f32 %v2216, %v2256
    %v2258 = vpop.f32.mrb[0].mxu0
    %v2259 = vpop.f32.mrb[0].mxu0
    %2260 = vdwg.mxu0
    %2261 = vmatprep.subr.bf16.mxu0 %v1634
    %2262 = vmatpush1.bf16.msra.mxu0 %v1633
    %2263 = vmatprep.subr.bf16.mxu0 %v1638
    %2264 = vmatpush1.bf16.msra.mxu0 %v1637
    %2265 = vmatprep.subr.bf16.mxu0 %v1642
    %2266 = vmatpush1.bf16.msra.mxu0 %v1641
    %2267 = vmatprep.subr.bf16.mxu0 %v1646
    %2268 = vmatpush1.bf16.msra.mxu0 %v1645
    %2269 = vmatprep.subr.bf16.mxu0 %v1650
    %2270 = vmatpush1.bf16.msra.mxu0 %v1649
    %2271 = vmatprep.subr.bf16.mxu0 %v1654
    %2272 = vmatpush1.bf16.msra.mxu0 %v1653
    %2273 = vmatprep.subr.bf16.mxu0 %v1658
    %2274 = vmatpush1.bf16.msra.mxu0 %v1657
    %2275 = vmatprep.subr.bf16.mxu0 %v1662
    %2276 = vmatpush1.bf16.msra.mxu0 %v1661
    %2277 = vmatprep.subr.bf16.mxu0 %v1666
    %2278 = vmatpush1.bf16.msra.mxu0 %v1665
    %2279 = vmatprep.subr.bf16.mxu0 %v1670
    %2280 = vmatpush1.bf16.msra.mxu0 %v1669
    %2281 = vmatprep.subr.bf16.mxu0 %v1674
    %2282 = vmatpush1.bf16.msra.mxu0 %v1673
    %2283 = vmatprep.subr.bf16.mxu0 %v1678
    %2284 = vmatpush1.bf16.msra.mxu0 %v1677
    %2285 = vmatprep.subr.bf16.mxu0 %v1682
    %2286 = vmatpush1.bf16.msra.mxu0 %v1681
    %2287 = vmatprep.subr.bf16.mxu0 %v1686
    %2288 = vmatpush1.bf16.msra.mxu0 %v1685
    %2289 = vmatprep.subr.bf16.mxu0 %v1690
    %2290 = vmatpush1.bf16.msra.mxu0 %v1689
    %2291 = vmatprep.subr.bf16.mxu0 %v1694
    %2292 = vmatpush1.bf16.msra.mxu0 %v1693
    %2293 = vmatprep.mubr.bf16.mxu0 %v454
    %2294 = vmatmul.mubr.bf16.gmra.mrb[0].mxu0 %v453
    %v2295 = vpop.f32.mrb[0].mxu0
    %v2296 = vadd.f32 %v2255, %v2295
    %v2297 = vpop.f32.mrb[0].mxu0
    %v2298 = vadd.f32 %v2257, %v2297
    %v2299 = vpop.f32.mrb[0].mxu0
    %v2300 = vpop.f32.mrb[0].mxu0
    %2301 = vdwg.mxu0
    %2302 = vmatprep.subr.bf16.mxu0 %v1698
    %2303 = vmatpush1.bf16.msra.mxu0 %v1697
    %2304 = vmatprep.subr.bf16.mxu0 %v1702
    %2305 = vmatpush1.bf16.msra.mxu0 %v1701
    %2306 = vmatprep.subr.bf16.mxu0 %v1706
    %2307 = vmatpush1.bf16.msra.mxu0 %v1705
    %2308 = vmatprep.subr.bf16.mxu0 %v1710
    %2309 = vmatpush1.bf16.msra.mxu0 %v1709
    %2310 = vmatprep.subr.bf16.mxu0 %v1714
    %2311 = vmatpush1.bf16.msra.mxu0 %v1713
    %2312 = vmatprep.subr.bf16.mxu0 %v1718
    %2313 = vmatpush1.bf16.msra.mxu0 %v1717
    %2314 = vmatprep.subr.bf16.mxu0 %v1722
    %2315 = vmatpush1.bf16.msra.mxu0 %v1721
    %2316 = vmatprep.subr.bf16.mxu0 %v1726
    %2317 = vmatpush1.bf16.msra.mxu0 %v1725
    %2318 = vmatprep.subr.bf16.mxu0 %v1730
    %2319 = vmatpush1.bf16.msra.mxu0 %v1729
    %2320 = vmatprep.subr.bf16.mxu0 %v1734
    %2321 = vmatpush1.bf16.msra.mxu0 %v1733
    %2322 = vmatprep.subr.bf16.mxu0 %v1738
    %2323 = vmatpush1.bf16.msra.mxu0 %v1737
    %2324 = vmatprep.subr.bf16.mxu0 %v1742
    %2325 = vmatpush1.bf16.msra.mxu0 %v1741
    %2326 = vmatprep.subr.bf16.mxu0 %v1746
    %2327 = vmatpush1.bf16.msra.mxu0 %v1745
    %2328 = vmatprep.subr.bf16.mxu0 %v1750
    %2329 = vmatpush1.bf16.msra.mxu0 %v1749
    %2330 = vmatprep.subr.bf16.mxu0 %v1754
    %2331 = vmatpush1.bf16.msra.mxu0 %v1753
    %2332 = vmatprep.subr.bf16.mxu0 %v1758
    %2333 = vmatpush1.bf16.msra.mxu0 %v1757
    %2334 = vmatprep.mubr.bf16.mxu0 %v456
    %2335 = vmatmul.mubr.bf16.gmra.mrb[0].mxu0 %v455
    %v2336 = vpop.f32.mrb[0].mxu0
    %v2337 = vadd.f32 %v2296, %v2336
    %v2338 = vpop.f32.mrb[0].mxu0
    %v2339 = vadd.f32 %v2298, %v2338
    %v2340 = vpop.f32.mrb[0].mxu0
    %v2341 = vpop.f32.mrb[0].mxu0
    %2342 = vdwg.mxu0
    %v2343 = vmax.f32 %v2173, 0.0
    %v2344 = vmax.f32 %v2175, 0.0
    %v2345 = vmax.f32 %v2337, 0.0
    %v2346 = vmax.f32 %v2339, 0.0
    %v2347 = vpack.c.bf16 %v2343, %v2343
    %v2348 = vpack.c.bf16 %v2344, %v2344
    %v2349 = vpack.c.bf16 %v2345, %v2345
    %v2350 = vpack.c.bf16 %v2346, %v2346
    %v2351 = vld [vmem:[#allocation10] sm:$0xff]
    %v2352 = vld [vmem:[#allocation10 + $0x8] sm:$0xff]
    %v2353 = vld [vmem:[#allocation10 + $0x10] sm:$0xff]
    %v2354 = vld [vmem:[#allocation10 + $0x18] sm:$0xff]
    %v2355 = vld [vmem:[#allocation10 + $0x20] sm:$0xff]
    %v2356 = vld [vmem:[#allocation10 + $0x28] sm:$0xff]
    %v2357 = vld [vmem:[#allocation10 + $0x30] sm:$0xff]
    %v2358 = vld [vmem:[#allocation10 + $0x38] sm:$0xff]
    %v2359 = vld [vmem:[#allocation10 + $0x40] sm:$0xff]
    %v2360 = vld [vmem:[#allocation10 + $0x48] sm:$0xff]
    %v2361 = vld [vmem:[#allocation10 + $0x50] sm:$0xff]
    %v2362 = vld [vmem:[#allocation10 + $0x58] sm:$0xff]
    %v2363 = vld [vmem:[#allocation10 + $0x60] sm:$0xff]
    %v2364 = vld [vmem:[#allocation10 + $0x68] sm:$0xff]
    %v2365 = vld [vmem:[#allocation10 + $0x70] sm:$0xff]
    %v2366 = vld [vmem:[#allocation10 + $0x78] sm:$0xff]
    %v2367 = vld [vmem:[#allocation10 + $0x80] sm:$0xff]
    %v2368 = vld [vmem:[#allocation10 + $0x88] sm:$0xff]
    %v2369 = vld [vmem:[#allocation10 + $0x90] sm:$0xff]
    %v2370 = vld [vmem:[#allocation10 + $0x98] sm:$0xff]
    %v2371 = vld [vmem:[#allocation10 + $0xa0] sm:$0xff]
    %v2372 = vld [vmem:[#allocation10 + $0xa8] sm:$0xff]
    %v2373 = vld [vmem:[#allocation10 + $0xb0] sm:$0xff]
    %v2374 = vld [vmem:[#allocation10 + $0xb8] sm:$0xff]
    %v2375 = vld [vmem:[#allocation10 + $0xc0] sm:$0xff]
    %v2376 = vld [vmem:[#allocation10 + $0xc8] sm:$0xff]
    %v2377 = vld [vmem:[#allocation10 + $0xd0] sm:$0xff]
    %v2378 = vld [vmem:[#allocation10 + $0xd8] sm:$0xff]
    %v2379 = vld [vmem:[#allocation10 + $0xe0] sm:$0xff]
    %v2380 = vld [vmem:[#allocation10 + $0xe8] sm:$0xff]
    %v2381 = vld [vmem:[#allocation10 + $0xf0] sm:$0xff]
    %v2382 = vld [vmem:[#allocation10 + $0xf8] sm:$0xff]
    %v2383 = vld [vmem:[#allocation10 + $0x100] sm:$0xff]
    %v2384 = vld [vmem:[#allocation10 + $0x108] sm:$0xff]
    %v2385 = vld [vmem:[#allocation10 + $0x110] sm:$0xff]
    %v2386 = vld [vmem:[#allocation10 + $0x118] sm:$0xff]
    %v2387 = vld [vmem:[#allocation10 + $0x120] sm:$0xff]
    %v2388 = vld [vmem:[#allocation10 + $0x128] sm:$0xff]
    %v2389 = vld [vmem:[#allocation10 + $0x130] sm:$0xff]
    %v2390 = vld [vmem:[#allocation10 + $0x138] sm:$0xff]
    %v2391 = vld [vmem:[#allocation10 + $0x140] sm:$0xff]
    %v2392 = vld [vmem:[#allocation10 + $0x148] sm:$0xff]
    %v2393 = vld [vmem:[#allocation10 + $0x150] sm:$0xff]
    %v2394 = vld [vmem:[#allocation10 + $0x158] sm:$0xff]
    %v2395 = vld [vmem:[#allocation10 + $0x160] sm:$0xff]
    %v2396 = vld [vmem:[#allocation10 + $0x168] sm:$0xff]
    %v2397 = vld [vmem:[#allocation10 + $0x170] sm:$0xff]
    %v2398 = vld [vmem:[#allocation10 + $0x178] sm:$0xff]
    %v2399 = vld [vmem:[#allocation10 + $0x180] sm:$0xff]
    %v2400 = vld [vmem:[#allocation10 + $0x188] sm:$0xff]
    %v2401 = vld [vmem:[#allocation10 + $0x190] sm:$0xff]
    %v2402 = vld [vmem:[#allocation10 + $0x198] sm:$0xff]
    %v2403 = vld [vmem:[#allocation10 + $0x1a0] sm:$0xff]
    %v2404 = vld [vmem:[#allocation10 + $0x1a8] sm:$0xff]
    %v2405 = vld [vmem:[#allocation10 + $0x1b0] sm:$0xff]
    %v2406 = vld [vmem:[#allocation10 + $0x1b8] sm:$0xff]
    %v2407 = vld [vmem:[#allocation10 + $0x1c0] sm:$0xff]
    %v2408 = vld [vmem:[#allocation10 + $0x1c8] sm:$0xff]
    %v2409 = vld [vmem:[#allocation10 + $0x1d0] sm:$0xff]
    %v2410 = vld [vmem:[#allocation10 + $0x1d8] sm:$0xff]
    %v2411 = vld [vmem:[#allocation10 + $0x1e0] sm:$0xff]
    %v2412 = vld [vmem:[#allocation10 + $0x1e8] sm:$0xff]
    %v2413 = vld [vmem:[#allocation10 + $0x1f0] sm:$0xff]
    %v2414 = vld [vmem:[#allocation10 + $0x1f8] sm:$0xff]
    %v2415 = vld [vmem:[%s6] sm:$0x3]
    %v2417 = vlaneseq
    %v2418 = vshrl.u32 %v2417, 7
    %v2419 = vsub.s32 0, %v2418
    %v2420 = vrot.slane %v2415, %v2419
    %v2421 = vlaneseq
    %v2422 = vshrl.u32 %v2421, 7
    %v2423 = vsub.s32 1, %v2422
    %v2424 = vrot.slane %v2415, %v2423
    %v2491 = vunpack.c.l.b16 %v2351
    %v2492 = vunpack.c.h.b16 %v2351
    %v2493 = vunpack.c.l.b16 %v2352
    %v2494 = vunpack.c.h.b16 %v2352
    %v2495 = vunpack.c.l.b16 %v2353
    %v2496 = vunpack.c.h.b16 %v2353
    %v2497 = vunpack.c.l.b16 %v2354
    %v2498 = vunpack.c.h.b16 %v2354
    %v2499 = vunpack.c.l.b16 %v2355
    %v2500 = vunpack.c.h.b16 %v2355
    %v2501 = vunpack.c.l.b16 %v2356
    %v2502 = vunpack.c.h.b16 %v2356
    %v2503 = vunpack.c.l.b16 %v2357
    %v2504 = vunpack.c.h.b16 %v2357
    %v2505 = vunpack.c.l.b16 %v2358
    %v2506 = vunpack.c.h.b16 %v2358
    %v2507 = vunpack.c.l.b16 %v2359
    %v2508 = vunpack.c.h.b16 %v2359
    %v2509 = vunpack.c.l.b16 %v2360
    %v2510 = vunpack.c.h.b16 %v2360
    %v2511 = vunpack.c.l.b16 %v2361
    %v2512 = vunpack.c.h.b16 %v2361
    %v2513 = vunpack.c.l.b16 %v2362
    %v2514 = vunpack.c.h.b16 %v2362
    %v2515 = vunpack.c.l.b16 %v2363
    %v2516 = vunpack.c.h.b16 %v2363
    %v2517 = vunpack.c.l.b16 %v2364
    %v2518 = vunpack.c.h.b16 %v2364
    %v2519 = vunpack.c.l.b16 %v2365
    %v2520 = vunpack.c.h.b16 %v2365
    %v2521 = vunpack.c.l.b16 %v2366
    %v2522 = vunpack.c.h.b16 %v2366
    %v2523 = vunpack.c.l.b16 %v2367
    %v2524 = vunpack.c.h.b16 %v2367
    %v2525 = vunpack.c.l.b16 %v2368
    %v2526 = vunpack.c.h.b16 %v2368
    %v2527 = vunpack.c.l.b16 %v2369
    %v2528 = vunpack.c.h.b16 %v2369
    %v2529 = vunpack.c.l.b16 %v2370
    %v2530 = vunpack.c.h.b16 %v2370
    %v2531 = vunpack.c.l.b16 %v2371
    %v2532 = vunpack.c.h.b16 %v2371
    %v2533 = vunpack.c.l.b16 %v2372
    %v2534 = vunpack.c.h.b16 %v2372
    %v2535 = vunpack.c.l.b16 %v2373
    %v2536 = vunpack.c.h.b16 %v2373
    %v2537 = vunpack.c.l.b16 %v2374
    %v2538 = vunpack.c.h.b16 %v2374
    %v2539 = vunpack.c.l.b16 %v2375
    %v2540 = vunpack.c.h.b16 %v2375
    %v2541 = vunpack.c.l.b16 %v2376
    %v2542 = vunpack.c.h.b16 %v2376
    %v2543 = vunpack.c.l.b16 %v2377
    %v2544 = vunpack.c.h.b16 %v2377
    %v2545 = vunpack.c.l.b16 %v2378
    %v2546 = vunpack.c.h.b16 %v2378
    %v2547 = vunpack.c.l.b16 %v2379
    %v2548 = vunpack.c.h.b16 %v2379
    %v2549 = vunpack.c.l.b16 %v2380
    %v2550 = vunpack.c.h.b16 %v2380
    %v2551 = vunpack.c.l.b16 %v2381
    %v2552 = vunpack.c.h.b16 %v2381
    %v2553 = vunpack.c.l.b16 %v2382
    %v2554 = vunpack.c.h.b16 %v2382
    %v2555 = vunpack.c.l.b16 %v2383
    %v2556 = vunpack.c.h.b16 %v2383
    %v2557 = vunpack.c.l.b16 %v2384
    %v2558 = vunpack.c.h.b16 %v2384
    %v2559 = vunpack.c.l.b16 %v2385
    %v2560 = vunpack.c.h.b16 %v2385
    %v2561 = vunpack.c.l.b16 %v2386
    %v2562 = vunpack.c.h.b16 %v2386
    %v2563 = vunpack.c.l.b16 %v2387
    %v2564 = vunpack.c.h.b16 %v2387
    %v2565 = vunpack.c.l.b16 %v2388
    %v2566 = vunpack.c.h.b16 %v2388
    %v2567 = vunpack.c.l.b16 %v2389
    %v2568 = vunpack.c.h.b16 %v2389
    %v2569 = vunpack.c.l.b16 %v2390
    %v2570 = vunpack.c.h.b16 %v2390
    %v2571 = vunpack.c.l.b16 %v2391
    %v2572 = vunpack.c.h.b16 %v2391
    %v2573 = vunpack.c.l.b16 %v2392
    %v2574 = vunpack.c.h.b16 %v2392
    %v2575 = vunpack.c.l.b16 %v2393
    %v2576 = vunpack.c.h.b16 %v2393
    %v2577 = vunpack.c.l.b16 %v2394
    %v2578 = vunpack.c.h.b16 %v2394
    %v2579 = vunpack.c.l.b16 %v2395
    %v2580 = vunpack.c.h.b16 %v2395
    %v2581 = vunpack.c.l.b16 %v2396
    %v2582 = vunpack.c.h.b16 %v2396
    %v2583 = vunpack.c.l.b16 %v2397
    %v2584 = vunpack.c.h.b16 %v2397
    %v2585 = vunpack.c.l.b16 %v2398
    %v2586 = vunpack.c.h.b16 %v2398
    %v2587 = vunpack.c.l.b16 %v2399
    %v2588 = vunpack.c.h.b16 %v2399
    %v2589 = vunpack.c.l.b16 %v2400
    %v2590 = vunpack.c.h.b16 %v2400
    %v2591 = vunpack.c.l.b16 %v2401
    %v2592 = vunpack.c.h.b16 %v2401
    %v2593 = vunpack.c.l.b16 %v2402
    %v2594 = vunpack.c.h.b16 %v2402
    %v2595 = vunpack.c.l.b16 %v2403
    %v2596 = vunpack.c.h.b16 %v2403
    %v2597 = vunpack.c.l.b16 %v2404
    %v2598 = vunpack.c.h.b16 %v2404
    %v2599 = vunpack.c.l.b16 %v2405
    %v2600 = vunpack.c.h.b16 %v2405
    %v2601 = vunpack.c.l.b16 %v2406
    %v2602 = vunpack.c.h.b16 %v2406
    %v2603 = vunpack.c.l.b16 %v2407
    %v2604 = vunpack.c.h.b16 %v2407
    %v2605 = vunpack.c.l.b16 %v2408
    %v2606 = vunpack.c.h.b16 %v2408
    %v2607 = vunpack.c.l.b16 %v2409
    %v2608 = vunpack.c.h.b16 %v2409
    %v2609 = vunpack.c.l.b16 %v2410
    %v2610 = vunpack.c.h.b16 %v2410
    %v2611 = vunpack.c.l.b16 %v2411
    %v2612 = vunpack.c.h.b16 %v2411
    %v2613 = vunpack.c.l.b16 %v2412
    %v2614 = vunpack.c.h.b16 %v2412
    %v2615 = vunpack.c.l.b16 %v2413
    %v2616 = vunpack.c.h.b16 %v2413
    %v2617 = vunpack.c.l.b16 %v2414
    %v2618 = vunpack.c.h.b16 %v2414
    %v2619 = vpack.c.b16 %v2493, %v2491
    %v2620 = vpack.c.b16 %v2494, %v2492
    %v2621 = vpack.c.b16 %v2497, %v2495
    %v2622 = vpack.c.b16 %v2498, %v2496
    %v2623 = vpack.c.b16 %v2501, %v2499
    %v2624 = vpack.c.b16 %v2502, %v2500
    %v2625 = vpack.c.b16 %v2505, %v2503
    %v2626 = vpack.c.b16 %v2506, %v2504
    %v2627 = vpack.c.b16 %v2509, %v2507
    %v2628 = vpack.c.b16 %v2510, %v2508
    %v2629 = vpack.c.b16 %v2513, %v2511
    %v2630 = vpack.c.b16 %v2514, %v2512
    %v2631 = vpack.c.b16 %v2517, %v2515
    %v2632 = vpack.c.b16 %v2518, %v2516
    %v2633 = vpack.c.b16 %v2521, %v2519
    %v2634 = vpack.c.b16 %v2522, %v2520
    %v2635 = vpack.c.b16 %v2525, %v2523
    %v2636 = vpack.c.b16 %v2526, %v2524
    %v2637 = vpack.c.b16 %v2529, %v2527
    %v2638 = vpack.c.b16 %v2530, %v2528
    %v2639 = vpack.c.b16 %v2533, %v2531
    %v2640 = vpack.c.b16 %v2534, %v2532
    %v2641 = vpack.c.b16 %v2537, %v2535
    %v2642 = vpack.c.b16 %v2538, %v2536
    %v2643 = vpack.c.b16 %v2541, %v2539
    %v2644 = vpack.c.b16 %v2542, %v2540
    %v2645 = vpack.c.b16 %v2545, %v2543
    %v2646 = vpack.c.b16 %v2546, %v2544
    %v2647 = vpack.c.b16 %v2549, %v2547
    %v2648 = vpack.c.b16 %v2550, %v2548
    %v2649 = vpack.c.b16 %v2553, %v2551
    %v2650 = vpack.c.b16 %v2554, %v2552
    %v2651 = vpack.c.b16 %v2557, %v2555
    %v2652 = vpack.c.b16 %v2558, %v2556
    %v2653 = vpack.c.b16 %v2561, %v2559
    %v2654 = vpack.c.b16 %v2562, %v2560
    %v2655 = vpack.c.b16 %v2565, %v2563
    %v2656 = vpack.c.b16 %v2566, %v2564
    %v2657 = vpack.c.b16 %v2569, %v2567
    %v2658 = vpack.c.b16 %v2570, %v2568
    %v2659 = vpack.c.b16 %v2573, %v2571
    %v2660 = vpack.c.b16 %v2574, %v2572
    %v2661 = vpack.c.b16 %v2577, %v2575
    %v2662 = vpack.c.b16 %v2578, %v2576
    %v2663 = vpack.c.b16 %v2581, %v2579
    %v2664 = vpack.c.b16 %v2582, %v2580
    %v2665 = vpack.c.b16 %v2585, %v2583
    %v2666 = vpack.c.b16 %v2586, %v2584
    %v2667 = vpack.c.b16 %v2589, %v2587
    %v2668 = vpack.c.b16 %v2590, %v2588
    %v2669 = vpack.c.b16 %v2593, %v2591
    %v2670 = vpack.c.b16 %v2594, %v2592
    %v2671 = vpack.c.b16 %v2597, %v2595
    %v2672 = vpack.c.b16 %v2598, %v2596
    %v2673 = vpack.c.b16 %v2601, %v2599
    %v2674 = vpack.c.b16 %v2602, %v2600
    %v2675 = vpack.c.b16 %v2605, %v2603
    %v2676 = vpack.c.b16 %v2606, %v2604
    %v2677 = vpack.c.b16 %v2609, %v2607
    %v2678 = vpack.c.b16 %v2610, %v2608
    %v2679 = vpack.c.b16 %v2613, %v2611
    %v2680 = vpack.c.b16 %v2614, %v2612
    %v2681 = vpack.c.b16 %v2617, %v2615
    %v2682 = vpack.c.b16 %v2618, %v2616
    %2747 = vmatprep.subr.bf16.mxu0 %v2620
    %2748 = vmatpush1.bf16.msra.mxu0 %v2619
    %2749 = vmatprep.subr.bf16.mxu0 %v2622
    %2750 = vmatpush1.bf16.msra.mxu0 %v2621
    %2751 = vmatprep.subr.bf16.mxu0 %v2624
    %2752 = vmatpush1.bf16.msra.mxu0 %v2623
    %2753 = vmatprep.subr.bf16.mxu0 %v2626
    %2754 = vmatpush1.bf16.msra.mxu0 %v2625
    %2755 = vmatprep.subr.bf16.mxu0 %v2628
    %2756 = vmatpush1.bf16.msra.mxu0 %v2627
    %2757 = vmatprep.subr.bf16.mxu0 %v2630
    %2758 = vmatpush1.bf16.msra.mxu0 %v2629
    %2759 = vmatprep.subr.bf16.mxu0 %v2632
    %2760 = vmatpush1.bf16.msra.mxu0 %v2631
    %2761 = vmatprep.subr.bf16.mxu0 %v2634
    %2762 = vmatpush1.bf16.msra.mxu0 %v2633
    %2763 = vmatprep.subr.bf16.mxu0 %v2636
    %2764 = vmatpush1.bf16.msra.mxu0 %v2635
    %2765 = vmatprep.subr.bf16.mxu0 %v2638
    %2766 = vmatpush1.bf16.msra.mxu0 %v2637
    %2767 = vmatprep.subr.bf16.mxu0 %v2640
    %2768 = vmatpush1.bf16.msra.mxu0 %v2639
    %2769 = vmatprep.subr.bf16.mxu0 %v2642
    %2770 = vmatpush1.bf16.msra.mxu0 %v2641
    %2771 = vmatprep.subr.bf16.mxu0 %v2644
    %2772 = vmatpush1.bf16.msra.mxu0 %v2643
    %2773 = vmatprep.subr.bf16.mxu0 %v2646
    %2774 = vmatpush1.bf16.msra.mxu0 %v2645
    %2775 = vmatprep.subr.bf16.mxu0 %v2648
    %2776 = vmatpush1.bf16.msra.mxu0 %v2647
    %2777 = vmatprep.subr.bf16.mxu0 %v2650
    %2778 = vmatpush1.bf16.msra.mxu0 %v2649
    %2779 = vmatprep.mubr.bf16.mxu0 %v2348
    %2780 = vmatmul.mubr.bf16.gmra.mrb[0].mxu0 %v2347
    %v2781 = vpop.f32.mrb[0].mxu0
    %v2782 = vadd.f32 %v2420, %v2781
    %v2783 = vpop.f32.mrb[0].mxu0
    %v2784 = vadd.f32 %v2424, %v2783
    %v2785 = vpop.f32.mrb[0].mxu0
    %v2786 = vpop.f32.mrb[0].mxu0
    %2787 = vdwg.mxu0
    %2788 = vmatprep.subr.bf16.mxu0 %v2652
    %2789 = vmatpush1.bf16.msra.mxu0 %v2651
    %2790 = vmatprep.subr.bf16.mxu0 %v2654
    %2791 = vmatpush1.bf16.msra.mxu0 %v2653
    %2792 = vmatprep.subr.bf16.mxu0 %v2656
    %2793 = vmatpush1.bf16.msra.mxu0 %v2655
    %2794 = vmatprep.subr.bf16.mxu0 %v2658
    %2795 = vmatpush1.bf16.msra.mxu0 %v2657
    %2796 = vmatprep.subr.bf16.mxu0 %v2660
    %2797 = vmatpush1.bf16.msra.mxu0 %v2659
    %2798 = vmatprep.subr.bf16.mxu0 %v2662
    %2799 = vmatpush1.bf16.msra.mxu0 %v2661
    %2800 = vmatprep.subr.bf16.mxu0 %v2664
    %2801 = vmatpush1.bf16.msra.mxu0 %v2663
    %2802 = vmatprep.subr.bf16.mxu0 %v2666
    %2803 = vmatpush1.bf16.msra.mxu0 %v2665
    %2804 = vmatprep.subr.bf16.mxu0 %v2668
    %2805 = vmatpush1.bf16.msra.mxu0 %v2667
    %2806 = vmatprep.subr.bf16.mxu0 %v2670
    %2807 = vmatpush1.bf16.msra.mxu0 %v2669
    %2808 = vmatprep.subr.bf16.mxu0 %v2672
    %2809 = vmatpush1.bf16.msra.mxu0 %v2671
    %2810 = vmatprep.subr.bf16.mxu0 %v2674
    %2811 = vmatpush1.bf16.msra.mxu0 %v2673
    %2812 = vmatprep.subr.bf16.mxu0 %v2676
    %2813 = vmatpush1.bf16.msra.mxu0 %v2675
    %2814 = vmatprep.subr.bf16.mxu0 %v2678
    %2815 = vmatpush1.bf16.msra.mxu0 %v2677
    %2816 = vmatprep.subr.bf16.mxu0 %v2680
    %2817 = vmatpush1.bf16.msra.mxu0 %v2679
    %2818 = vmatprep.subr.bf16.mxu0 %v2682
    %2819 = vmatpush1.bf16.msra.mxu0 %v2681
    %2820 = vmatprep.mubr.bf16.mxu0 %v2350
    %2821 = vmatmul.mubr.bf16.gmra.mrb[0].mxu0 %v2349
    %v2822 = vpop.f32.mrb[0].mxu0
    %v2823 = vadd.f32 %v2782, %v2822
    %v2824 = vpop.f32.mrb[0].mxu0
    %v2825 = vadd.f32 %v2784, %v2824
    %v2826 = vpop.f32.mrb[0].mxu0
    %v2827 = vpop.f32.mrb[0].mxu0
    %2828 = vdwg.mxu0
    %v2829 = vmax.f32 %v2823, 0.0
    %v2830 = vmax.f32 %v2825, 0.0
    %v2831 = vpack.c.bf16 %v2829, %v2829
    %v2832 = vpack.c.bf16 %v2830, %v2830
    %v2833 = vld [vmem:[#allocation11] sm:$0xf]
    %v2834 = vld [vmem:[#allocation11 + $0x4] sm:$0xf]
    %v2835 = vld [vmem:[#allocation11 + $0x8] sm:$0xf]
    %v2836 = vld [vmem:[#allocation11 + $0xc] sm:$0xf]
    %v2837 = vld [vmem:[#allocation11 + $0x10] sm:$0xf]
    %v2838 = vld [vmem:[#allocation11 + $0x14] sm:$0xf]
    %v2839 = vld [vmem:[#allocation11 + $0x18] sm:$0xf]
    %v2840 = vld [vmem:[#allocation11 + $0x1c] sm:$0xf]
    %v2841 = vld [vmem:[#allocation11 + $0x20] sm:$0xf]
    %v2842 = vld [vmem:[#allocation11 + $0x24] sm:$0xf]
    %v2843 = vld [vmem:[#allocation11 + $0x28] sm:$0xf]
    %v2844 = vld [vmem:[#allocation11 + $0x2c] sm:$0xf]
    %v2845 = vld [vmem:[#allocation11 + $0x30] sm:$0xf]
    %v2846 = vld [vmem:[#allocation11 + $0x34] sm:$0xf]
    %v2847 = vld [vmem:[#allocation11 + $0x38] sm:$0xf]
    %v2848 = vld [vmem:[#allocation11 + $0x3c] sm:$0xf]
    %v2849 = vld [vmem:[#allocation11 + $0x40] sm:$0xf]
    %v2850 = vld [vmem:[#allocation11 + $0x44] sm:$0xf]
    %v2851 = vld [vmem:[#allocation11 + $0x48] sm:$0xf]
    %v2852 = vld [vmem:[#allocation11 + $0x4c] sm:$0xf]
    %v2853 = vld [vmem:[#allocation11 + $0x50] sm:$0xf]
    %v2854 = vld [vmem:[#allocation11 + $0x54] sm:$0xf]
    %v2855 = vld [vmem:[#allocation11 + $0x58] sm:$0xf]
    %v2856 = vld [vmem:[#allocation11 + $0x5c] sm:$0xf]
    %v2857 = vld [vmem:[#allocation11 + $0x60] sm:$0xf]
    %v2858 = vld [vmem:[#allocation11 + $0x64] sm:$0xf]
    %v2859 = vld [vmem:[#allocation11 + $0x68] sm:$0xf]
    %v2860 = vld [vmem:[#allocation11 + $0x6c] sm:$0xf]
    %v2861 = vld [vmem:[#allocation11 + $0x70] sm:$0xf]
    %v2862 = vld [vmem:[#allocation11 + $0x74] sm:$0xf]
    %v2863 = vld [vmem:[#allocation11 + $0x78] sm:$0xf]
    %v2864 = vld [vmem:[#allocation11 + $0x7c] sm:$0xf]
    %v2865 = vld [vmem:[#allocation13] sm:$0x1]
    %v2867 = vlaneseq
    %v2868 = vshrl.u32 %v2867, 7
    %v2869 = vsub.s32 0, %v2868
    %v2870 = vrot.slane %v2865, %v2869
    %v2904 = vunpack.c.l.b16 %v2833
    %v2905 = vunpack.c.l.b16 %v2834
    %v2906 = vunpack.c.l.b16 %v2835
    %v2907 = vunpack.c.l.b16 %v2836
    %v2908 = vunpack.c.l.b16 %v2837
    %v2909 = vunpack.c.l.b16 %v2838
    %v2910 = vunpack.c.l.b16 %v2839
    %v2911 = vunpack.c.l.b16 %v2840
    %v2912 = vunpack.c.l.b16 %v2841
    %v2913 = vunpack.c.l.b16 %v2842
    %v2914 = vunpack.c.l.b16 %v2843
    %v2915 = vunpack.c.l.b16 %v2844
    %v2916 = vunpack.c.l.b16 %v2845
    %v2917 = vunpack.c.l.b16 %v2846
    %v2918 = vunpack.c.l.b16 %v2847
    %v2919 = vunpack.c.l.b16 %v2848
    %v2920 = vunpack.c.l.b16 %v2849
    %v2921 = vunpack.c.l.b16 %v2850
    %v2922 = vunpack.c.l.b16 %v2851
    %v2923 = vunpack.c.l.b16 %v2852
    %v2924 = vunpack.c.l.b16 %v2853
    %v2925 = vunpack.c.l.b16 %v2854
    %v2926 = vunpack.c.l.b16 %v2855
    %v2927 = vunpack.c.l.b16 %v2856
    %v2928 = vunpack.c.l.b16 %v2857
    %v2929 = vunpack.c.l.b16 %v2858
    %v2930 = vunpack.c.l.b16 %v2859
    %v2931 = vunpack.c.l.b16 %v2860
    %v2932 = vunpack.c.l.b16 %v2861
    %v2933 = vunpack.c.l.b16 %v2862
    %v2934 = vunpack.c.l.b16 %v2863
    %v2935 = vunpack.c.l.b16 %v2864
    %v2936 = vpack.c.b16 %v2905, %v2904
    %v2937 = vpack.c.b16 %v2907, %v2906
    %v2938 = vpack.c.b16 %v2909, %v2908
    %v2939 = vpack.c.b16 %v2911, %v2910
    %v2940 = vpack.c.b16 %v2913, %v2912
    %v2941 = vpack.c.b16 %v2915, %v2914
    %v2942 = vpack.c.b16 %v2917, %v2916
    %v2943 = vpack.c.b16 %v2919, %v2918
    %v2944 = vpack.c.b16 %v2921, %v2920
    %v2945 = vpack.c.b16 %v2923, %v2922
    %v2946 = vpack.c.b16 %v2925, %v2924
    %v2947 = vpack.c.b16 %v2927, %v2926
    %v2948 = vpack.c.b16 %v2929, %v2928
    %v2949 = vpack.c.b16 %v2931, %v2930
    %v2950 = vpack.c.b16 %v2933, %v2932
    %v2951 = vpack.c.b16 %v2935, %v2934
    %2968 = vmatprep.subr.bf16.mxu0 0
    %2969 = vmatpush1.bf16.msra.mxu0 %v2936
    %2970 = vmatprep.subr.bf16.mxu0 0
    %2971 = vmatpush1.bf16.msra.mxu0 %v2937
    %2972 = vmatprep.subr.bf16.mxu0 0
    %2973 = vmatpush1.bf16.msra.mxu0 %v2938
    %2974 = vmatprep.subr.bf16.mxu0 0
    %2975 = vmatpush1.bf16.msra.mxu0 %v2939
    %2976 = vmatprep.subr.bf16.mxu0 0
    %2977 = vmatpush1.bf16.msra.mxu0 %v2940
    %2978 = vmatprep.subr.bf16.mxu0 0
    %2979 = vmatpush1.bf16.msra.mxu0 %v2941
    %2980 = vmatprep.subr.bf16.mxu0 0
    %2981 = vmatpush1.bf16.msra.mxu0 %v2942
    %2982 = vmatprep.subr.bf16.mxu0 0
    %2983 = vmatpush1.bf16.msra.mxu0 %v2943
    %2984 = vmatprep.subr.bf16.mxu0 0
    %2985 = vmatpush1.bf16.msra.mxu0 %v2944
    %2986 = vmatprep.subr.bf16.mxu0 0
    %2987 = vmatpush1.bf16.msra.mxu0 %v2945
    %2988 = vmatprep.subr.bf16.mxu0 0
    %2989 = vmatpush1.bf16.msra.mxu0 %v2946
    %2990 = vmatprep.subr.bf16.mxu0 0
    %2991 = vmatpush1.bf16.msra.mxu0 %v2947
    %2992 = vmatprep.subr.bf16.mxu0 0
    %2993 = vmatpush1.bf16.msra.mxu0 %v2948
    %2994 = vmatprep.subr.bf16.mxu0 0
    %2995 = vmatpush1.bf16.msra.mxu0 %v2949
    %2996 = vmatprep.subr.bf16.mxu0 0
    %2997 = vmatpush1.bf16.msra.mxu0 %v2950
    %2998 = vmatprep.subr.bf16.mxu0 0
    %2999 = vmatpush1.bf16.msra.mxu0 %v2951
    %3000 = vmatprep.mubr.bf16.mxu0 %v2832
    %3001 = vmatmul.mubr.bf16.gmra.mrb[0].mxu0 %v2831
    %v3002 = vpop.f32.mrb[0].mxu0
    %v3003 = vadd.f32 %v2870, %v3002
    %v3004 = vpop.f32.mrb[0].mxu0
    %v3005 = vpop.f32.mrb[0].mxu0
    %v3006 = vpop.f32.mrb[0].mxu0
    %3007 = vdwg.mxu0
    %v3008 = vmax.f32 %v3003, 0.0
    %v3009 = vpack.c.bf16 %v3008, %v3008
    %v3010 = vld [vmem:[%s9] sm:$0xf]
    %v3011 = vld [vmem:[%s9 + $0x4] sm:$0xf]
    %v3012 = vld [vmem:[%s9 + $0x8] sm:$0xf]
    %v3013 = vld [vmem:[%s9 + $0xc] sm:$0xf]
    %v3014 = vld [vmem:[%s9 + $0x10] sm:$0xf]
    %v3015 = vld [vmem:[%s9 + $0x14] sm:$0xf]
    %v3016 = vld [vmem:[%s9 + $0x18] sm:$0xf]
    %v3017 = vld [vmem:[%s9 + $0x1c] sm:$0xf]
    %v3018 = vld [vmem:[%s9 + $0x20] sm:$0xf]
    %v3019 = vld [vmem:[%s9 + $0x24] sm:$0xf]
    %v3020 = vld [vmem:[%s9 + $0x28] sm:$0xf]
    %v3021 = vld [vmem:[%s9 + $0x2c] sm:$0xf]
    %v3022 = vld [vmem:[%s9 + $0x30] sm:$0xf]
    %v3023 = vld [vmem:[%s9 + $0x34] sm:$0xf]
    %v3024 = vld [vmem:[%s9 + $0x38] sm:$0xf]
    %v3025 = vld [vmem:[%s9 + $0x3c] sm:$0xf]
    %v3026 = vld [vmem:[%s10] sm:$0x1]
    %v3028 = vlaneseq
    %v3029 = vshrl.u32 %v3028, 7
    %v3030 = vsub.s32 0, %v3029
    %v3031 = vrot.slane %v3026, %v3030
    %v3049 = vunpack.c.l.b16 %v3010
    %v3050 = vunpack.c.l.b16 %v3011
    %v3051 = vunpack.c.l.b16 %v3012
    %v3052 = vunpack.c.l.b16 %v3013
    %v3053 = vunpack.c.l.b16 %v3014
    %v3054 = vunpack.c.l.b16 %v3015
    %v3055 = vunpack.c.l.b16 %v3016
    %v3056 = vunpack.c.l.b16 %v3017
    %v3057 = vunpack.c.l.b16 %v3018
    %v3058 = vunpack.c.l.b16 %v3019
    %v3059 = vunpack.c.l.b16 %v3020
    %v3060 = vunpack.c.l.b16 %v3021
    %v3061 = vunpack.c.l.b16 %v3022
    %v3062 = vunpack.c.l.b16 %v3023
    %v3063 = vunpack.c.l.b16 %v3024
    %v3064 = vunpack.c.l.b16 %v3025
    %v3065 = vpack.c.b16 %v3050, %v3049
    %v3066 = vpack.c.b16 %v3052, %v3051
    %v3067 = vpack.c.b16 %v3054, %v3053
    %v3068 = vpack.c.b16 %v3056, %v3055
    %v3069 = vpack.c.b16 %v3058, %v3057
    %v3070 = vpack.c.b16 %v3060, %v3059
    %v3071 = vpack.c.b16 %v3062, %v3061
    %v3072 = vpack.c.b16 %v3064, %v3063
    %3081 = vmatprep.subr.bf16.mxu0 0
    %3082 = vmatpush1.bf16.msra.mxu0 %v3065
    %3083 = vmatprep.subr.bf16.mxu0 0
    %3084 = vmatpush1.bf16.msra.mxu0 %v3066
    %3085 = vmatprep.subr.bf16.mxu0 0
    %3086 = vmatpush1.bf16.msra.mxu0 %v3067
    %3087 = vmatprep.subr.bf16.mxu0 0
    %3088 = vmatpush1.bf16.msra.mxu0 %v3068
    %3089 = vmatprep.subr.bf16.mxu0 0
    %3090 = vmatpush1.bf16.msra.mxu0 %v3069
    %3091 = vmatprep.subr.bf16.mxu0 0
    %3092 = vmatpush1.bf16.msra.mxu0 %v3070
    %3093 = vmatprep.subr.bf16.mxu0 0
    %3094 = vmatpush1.bf16.msra.mxu0 %v3071
    %3095 = vmatprep.subr.bf16.mxu0 0
    %3096 = vmatpush1.bf16.msra.mxu0 %v3072
    %3097 = vmatprep.subr.bf16.mxu0 0
    %3098 = vmatpush1.bf16.msra.mxu0 0
    %3099 = vmatprep.subr.bf16.mxu0 0
    %3100 = vmatpush1.bf16.msra.mxu0 0
    %3101 = vmatprep.subr.bf16.mxu0 0
    %3102 = vmatpush1.bf16.msra.mxu0 0
    %3103 = vmatprep.subr.bf16.mxu0 0
    %3104 = vmatpush1.bf16.msra.mxu0 0
    %3105 = vmatprep.subr.bf16.mxu0 0
    %3106 = vmatpush1.bf16.msra.mxu0 0
    %3107 = vmatprep.subr.bf16.mxu0 0
    %3108 = vmatpush1.bf16.msra.mxu0 0
    %3109 = vmatprep.subr.bf16.mxu0 0
    %3110 = vmatpush1.bf16.msra.mxu0 0
    %3111 = vmatprep.subr.bf16.mxu0 0
    %3112 = vmatpush1.bf16.msra.mxu0 0
    %3113 = vmatprep.mubr.bf16.mxu0 0
    %3114 = vmatmul.mubr.bf16.gmra.mrb[0].mxu0 %v3009
    %v3115 = vpop.f32.mrb[0].mxu0
    %v3116 = vadd.f32 %v3031, %v3115
    %v3117 = vpop.f32.mrb[0].mxu0
    %v3118 = vpop.f32.mrb[0].mxu0
    %v3119 = vpop.f32.mrb[0].mxu0
    %3120 = vdwg.mxu0
    %v3121 = vmax.f32 %v3116, 0.0
    %v3122 = vpack.c.bf16 %v3121, %v3121
    %v3123 = vld [vmem:[%s11] sm:$0xf]
    %v3124 = vld [vmem:[%s11 + $0x4] sm:$0xf]
    %v3125 = vld [vmem:[%s11 + $0x8] sm:$0xf]
    %v3126 = vld [vmem:[%s11 + $0xc] sm:$0xf]
    %v3127 = vld [vmem:[%s11 + $0x10] sm:$0xf]
    %v3128 = vld [vmem:[%s11 + $0x14] sm:$0xf]
    %v3129 = vld [vmem:[%s11 + $0x18] sm:$0xf]
    %v3130 = vld [vmem:[%s11 + $0x1c] sm:$0xf]
    %v3131 = vld [vmem:[%s12] sm:$0x1]
    %v3133 = vlaneseq
    %v3134 = vshrl.u32 %v3133, 7
    %v3135 = vsub.s32 0, %v3134
    %v3136 = vrot.slane %v3131, %v3135
    %v3146 = vunpack.c.l.b16 %v3123
    %v3147 = vunpack.c.l.b16 %v3124
    %v3148 = vunpack.c.l.b16 %v3125
    %v3149 = vunpack.c.l.b16 %v3126
    %v3150 = vunpack.c.l.b16 %v3127
    %v3151 = vunpack.c.l.b16 %v3128
    %v3152 = vunpack.c.l.b16 %v3129
    %v3153 = vunpack.c.l.b16 %v3130
    %v3154 = vpack.c.b16 %v3147, %v3146
    %v3155 = vpack.c.b16 %v3149, %v3148
    %v3156 = vpack.c.b16 %v3151, %v3150
    %v3157 = vpack.c.b16 %v3153, %v3152
    %vm3162 = vcmask 523264
    %v3164 = vsel %vm3162, %v3122, 0
    %3166 = vmatprep.subr.bf16.mxu0 0
    %3167 = vmatpush1.bf16.msra.mxu0 %v3154
    %3168 = vmatprep.subr.bf16.mxu0 0
    %3169 = vmatpush1.bf16.msra.mxu0 %v3155
    %3170 = vmatprep.subr.bf16.mxu0 0
    %3171 = vmatpush1.bf16.msra.mxu0 %v3156
    %3172 = vmatprep.subr.bf16.mxu0 0
    %3173 = vmatpush1.bf16.msra.mxu0 %v3157
    %3174 = vmatprep.subr.bf16.mxu0 0
    %3175 = vmatpush1.bf16.msra.mxu0 0
    %3176 = vmatprep.subr.bf16.mxu0 0
    %3177 = vmatpush1.bf16.msra.mxu0 0
    %3178 = vmatprep.subr.bf16.mxu0 0
    %3179 = vmatpush1.bf16.msra.mxu0 0
    %3180 = vmatprep.subr.bf16.mxu0 0
    %3181 = vmatpush1.bf16.msra.mxu0 0
    %3182 = vmatprep.subr.bf16.mxu0 0
    %3183 = vmatpush1.bf16.msra.mxu0 0
    %3184 = vmatprep.subr.bf16.mxu0 0
    %3185 = vmatpush1.bf16.msra.mxu0 0
    %3186 = vmatprep.subr.bf16.mxu0 0
    %3187 = vmatpush1.bf16.msra.mxu0 0
    %3188 = vmatprep.subr.bf16.mxu0 0
    %3189 = vmatpush1.bf16.msra.mxu0 0
    %3190 = vmatprep.subr.bf16.mxu0 0
    %3191 = vmatpush1.bf16.msra.mxu0 0
    %3192 = vmatprep.subr.bf16.mxu0 0
    %3193 = vmatpush1.bf16.msra.mxu0 0
    %3194 = vmatprep.subr.bf16.mxu0 0
    %3195 = vmatpush1.bf16.msra.mxu0 0
    %3196 = vmatprep.subr.bf16.mxu0 0
    %3197 = vmatpush1.bf16.msra.mxu0 0
    %3198 = vmatprep.mubr.bf16.mxu0 0
    %3199 = vmatmul.mubr.bf16.gmra.mrb[0].mxu0 %v3164
    %v3200 = vpop.f32.mrb[0].mxu0
    %v3201 = vadd.f32 %v3136, %v3200
    %v3202 = vpop.f32.mrb[0].mxu0
    %v3203 = vpop.f32.mrb[0].mxu0
    %v3204 = vpop.f32.mrb[0].mxu0
    %3205 = vdwg.mxu0
    %vm3206 = vcmask 64512
    %v3207 = vsel %vm3206, %v3201, -inf
    %3208 = vmax.xlane.f32.xlu0 %v3207
    %v3209 = vpop.xlane.xlu0 %3208
    %v3210 = vsub.f32 %v3201, %v3209
    %v3211 = vmul.f32 %v3210, 1.442695
    %v3212 = vpow.pop %v3211
    %v3213 = vsel %vm3206, %v3212, 0.0
    %3214 = vadd.xlane.f32.xlu0 %v3213
    %v3215 = vpop.xlane.xlu0 %3214
    %v3216 = vrcp.pop %v3215
    %v3217 = vmul.f32 %v3215, %v3216
    %v3218 = vsub.f32 2.0, %v3217
    %v3219 = vmul.f32 %v3216, %v3218
    %v3220 = vmul.f32 %v3212, %v3219
    %3221 = vst.msk [vmem:[#allocation14] sm:$0xff] %vm3206, %v3220
    // Predicated region
    $region82: #{tpu_custom_call.1} parent=1 // pred_check
      _
    $region83: #{tpu_custom_call.1} parent=1 // pred_check_branch
      %3223 = sbr.rel (0) target = $region85
    $region84: #{tpu_custom_call.1} parent=1 // pred_region
      %s3225 = ssub.s32 128, 128
      %3226 = vsyncadd [#allocation4], %s3225
      %s3228 = sshll.u32 [#allocation14], 4
      %s3229 = int_to_ptr.vmem [resolvable:$true] %s3228
      %3231 = dma.vmem_to_hbm [thread:$0]  %s3229, 128, %s13, [#allocation4]
    $region85: #{tpu_custom_call.1} parent=1 // pred_fallthru
      _
    // Predicated region
    $region86: #{tpu_custom_call.1} parent=1 // pred_check
      _
    $region87: #{tpu_custom_call.1} parent=1 // pred_check_branch
      %3233 = sbr.rel (0) target = $region89
    $region88: #{tpu_custom_call.1} parent=1 // pred_region
      %3234 = dma.done [#allocation4], 128
    $region89: #{tpu_custom_call.1} parent=1 // pred_fallthru
      _
    %3235 = vsyncpa [#allocation3], 1
    %3236 = vsyncpa [#allocation6], 1
    %3237 = vsyncpa [#allocation9], 1
    %3238 = vsyncpa [#allocation12], 1
    %3239 = vsyncpa [#allocation4], 1

</llo_original>
